<compile_context>
chip_gen: v6e
topology: v6e:2x2x1
jax: 0.10.0
libtpu: 0.0.40
codegen_flags: <defaults>
</compile_context>

<pallas_src>
import numpy as np
import jax
import jax.numpy as jnp
from jax.experimental import pallas as pl
from jax.experimental.pallas import tpu as pltpu

# ---- module hyper-parameters (defaults of StandardRlModule / BaseModule / StepThreeModule) ----
GRAPH_SRC_DIMS = 23
GRAPH_DST_DIMS = 27
HIDDEN = 16          # graph_hidden_dims
HEADS = 5            # graph_heads
HEAD_DIMS = 8
OUT_DIMS = 3
NEG_SLOPE = 0.2      # GATv2Conv default negative_slope


def _round_up(x, m):
    return ((x + m - 1) // m) * m


def standard_rl_kernel(
    dst_x_ref, src_x_ref, mask_ref,
    w_src_ref, b_src_ref, w_dst_ref, b_dst_ref,
    w_l_ref, b_l_ref, w_r_ref, b_r_ref,
    att_grp_ref, grp_t_ref, conv_bias_ref,
    w1a_ref, w1b_ref, b1_ref, w2_ref, b2_ref,
    out_ref,
):
    """One destination-row tile: dst_x [T,27], src_x [K,T,23], mask [K,T,1] -> out [T,3]."""
    f32 = jnp.float32
    K = src_x_ref.shape[0]                      # static max fan-in per destination

    # ---- destination encoder + its GATv2 projection ----
    dst_enc = jnp.maximum(
        jnp.dot(dst_x_ref[...], w_dst_ref[...], preferred_element_type=f32)
        + b_dst_ref[...], 0.0)                                                   # [T, 16]
    x_r = jnp.dot(dst_enc, w_r_ref[...], preferred_element_type=f32) + b_r_ref[...]  # [T, H*C]

    # ---- per-slot source encoder, GATv2 projection and attention logits ----
    x_l = []        # lin_l(src_enc) per slot (bias included; reused as the message)
    score = []      # per-head attention logits per slot, [T, H]
    neg_big = jnp.float32(-1e30)
    for k in range(K):
        src_enc_k = jnp.maximum(
            jnp.dot(src_x_ref[k], w_src_ref[...], preferred_element_type=f32)
            + b_src_ref[...], 0.0)                                               # [T, 16]
        x_l_k = jnp.dot(src_enc_k, w_l_ref[...], preferred_element_type=f32) + b_l_ref[...]
        s_k = x_l_k + x_r
        s_k = jnp.where(s_k > 0, s_k, NEG_SLOPE * s_k)                           # leaky_relu
        # (t * att) @ grp  ==  t @ (grp * att)  -> att folded into att_grp [H*C, H]
        sc_k = jnp.dot(s_k, att_grp_ref[...], preferred_element_type=f32)        # [T, H]
        sc_k = jnp.where(mask_ref[k] > 0, sc_k, neg_big)                         # invalid slot
        x_l.append(x_l_k)
        score.append(sc_k)

    # ---- per-destination softmax over the K incoming-edge slots (per head) ----
    m = score[0]
    for k in range(1, K):
        m = jnp.maximum(m, score[k])                                             # per-dst max
    p = [jnp.exp(score[k] - m) * mask_ref[k] for k in range(K)]                  # [T, H] each
    denom = p[0]
    for k in range(1, K):
        denom = denom + p[k]
    inv = 1.0 / jnp.maximum(denom, jnp.float32(1e-30))                           # 0 edges -> alpha=0

    # ---- alpha-weighted message aggregation ----
    agg = None
    for k in range(K):
        alpha_k = p[k] * inv                                                     # [T, H]
        a_full_k = jnp.dot(alpha_k, grp_t_ref[...], preferred_element_type=f32)  # [T, H*C]
        contrib = a_full_k * x_l[k]
        agg = contrib if agg is None else agg + contrib
    conv = jnp.maximum(agg + conv_bias_ref[...], 0.0)                            # torch.relu(dst_convs)

    # ---- head MLP on cat([dst_enc, conv], -1), as split matmuls (no lane concat) ----
    h1 = jnp.maximum(
        jnp.dot(dst_enc, w1a_ref[...], preferred_element_type=f32)
        + jnp.dot(conv, w1b_ref[...], preferred_element_type=f32)
        + b1_ref[...], 0.0)
    out_ref[...] = (jnp.dot(h1, w2_ref[...], preferred_element_type=f32)
                    + b2_ref[...]).astype(out_ref.dtype)


def make_params(key):
    """Deterministic synthetic parameters (shapes match the torch module's __init__)."""
    hc = HEADS * HIDDEN
    names_shapes = [
        ("w_src", (GRAPH_SRC_DIMS, HIDDEN)), ("b_src", (1, HIDDEN)),
        ("w_dst", (GRAPH_DST_DIMS, HIDDEN)), ("b_dst", (1, HIDDEN)),
        ("w_l", (HIDDEN, hc)), ("b_l", (1, hc)),
        ("w_r", (HIDDEN, hc)), ("b_r", (1, hc)),
        ("att", (1, hc)),
        ("conv_bias", (1, hc)),
        ("w1a", (HIDDEN, HEAD_DIMS)), ("w1b", (hc, HEAD_DIMS)), ("b1", (1, HEAD_DIMS)),
        ("w2", (HEAD_DIMS, OUT_DIMS)), ("b2", (1, OUT_DIMS)),
    ]
    keys = jax.random.split(key, len(names_shapes))
    params = {}
    for (name, shape), k in zip(names_shapes, keys):
        fan_in = shape[0] if shape[0] > 1 else shape[1]
        params[name] = jax.random.normal(k, shape, dtype=jnp.float32) / np.sqrt(fan_in)
    # per-head grouping matrix G[h*C+c, h] = 1; att folded in for the score matmul.
    grp = np.zeros((hc, HEADS), dtype=np.float32)
    for h in range(HEADS):
        grp[h * HIDDEN:(h + 1) * HIDDEN, h] = 1.0
    params["att_grp"] = jnp.asarray(grp) * params["att"][0][:, None]   # [H*C, H]
    params["grp_t"] = jnp.asarray(grp.T)                               # [H, H*C]
    return params


def densify_edges(src_x, edge_index, num_dst, max_fanin=None):
    """Host-side analogue of collate_batch: pack per-edge source features into a dense
    [K, num_dst, src_dims] slot layout plus a validity mask (zero-padded slots)."""
    src_x = np.asarray(src_x, dtype=np.float32)
    ei = np.asarray(edge_index)
    src_idx, dst_idx = ei[0], ei[1]
    counts = np.bincount(dst_idx, minlength=num_dst) if src_idx.size else np.zeros(num_dst, np.int64)
    K = int(max_fanin) if max_fanin is not None else max(int(counts.max()) if counts.size else 1, 1)
    dense = np.zeros((K, num_dst, src_x.shape[1]), dtype=np.float32)
    mask = np.zeros((K, num_dst, 1), dtype=np.float32)
    slot = np.zeros(num_dst, dtype=np.int64)
    for e in range(src_idx.shape[0]):
        d = int(dst_idx[e]); k = int(slot[d]); slot[d] = k + 1
        dense[k, d] = src_x[src_idx[e]]
        mask[k, d, 0] = 1.0
    return jnp.asarray(dense), jnp.asarray(mask)


def standard_rl_forward(params, dst_x, src_dense, edge_mask, *, tile_nd=256, use_bf16=False):
    num_dst, dst_dims = dst_x.shape
    K, nd2, src_dims = src_dense.shape
    assert nd2 == num_dst and edge_mask.shape == (K, num_dst, 1)

    # destination-row tile: multiple of 8 (f32 sublane tiling), batch padded to a tile multiple.
    tile = min(int(tile_nd), _round_up(num_dst, 8))
    tile = max(8, (tile // 8) * 8)
    nd_pad = _round_up(num_dst, tile)
    if nd_pad != num_dst:
        pad = nd_pad - num_dst
        dst_x = jnp.pad(dst_x, ((0, pad), (0, 0)))
        src_dense = jnp.pad(src_dense, ((0, 0), (0, pad), (0, 0)))
        edge_mask = jnp.pad(edge_mask, ((0, 0), (0, pad), (0, 0)))
    n_tiles = nd_pad // tile

    # bf16 streaming of the big(ish) node-feature operands; accumulation stays f32 in-kernel.
    stream_dtype = jnp.bfloat16 if use_bf16 else jnp.float32
    dst_x = dst_x.astype(stream_dtype)
    src_dense = src_dense.astype(stream_dtype)
    w_src = params["w_src"].astype(stream_dtype)
    w_dst = params["w_dst"].astype(stream_dtype)

    inputs = [
        dst_x, src_dense, edge_mask.astype(jnp.float32),
        w_src, params["b_src"], w_dst, params["b_dst"],
        params["w_l"], params["b_l"], params["w_r"], params["b_r"],
        params["att_grp"], params["grp_t"], params["conv_bias"],
        params["w1a"], params["w1b"], params["b1"], params["w2"], params["b2"],
    ]

    data_specs = [
        pl.BlockSpec((tile, dst_dims), lambda i: (i, 0)),
        pl.BlockSpec((K, tile, src_dims), lambda i: (0, i, 0)),
        pl.BlockSpec((K, tile, 1), lambda i: (0, i, 0)),
    ]
    # small weights: full-array blocks with a constant index map (fetched once, no re-DMA per tile).
    weight_specs = [
        pl.BlockSpec(tuple(np.shape(w)), lambda i, _nd=np.ndim(w): (0,) * _nd)
        for w in inputs[3:]
    ]
    in_specs = data_specs + weight_specs
    out_spec = pl.BlockSpec((tile, OUT_DIMS), lambda i: (i, 0))

    # rough cost hint for the XLA scheduler
    hc = HEADS * HIDDEN
    e_rows = nd_pad * K
    flops = 2 * (nd_pad * (dst_dims * HIDDEN + HIDDEN * hc + HIDDEN * HEAD_DIMS
                           + hc * HEAD_DIMS + HEAD_DIMS * OUT_DIMS)
                 + e_rows * (src_dims * HIDDEN + HIDDEN * hc + hc * HEADS + HEADS * hc + hc))
    bytes_accessed = (sum(int(np.prod(np.shape(x))) * x.dtype.itemsize for x in inputs)
                      + nd_pad * OUT_DIMS * 4)

    out = pl.pallas_call(
        standard_rl_kernel,
        out_shape=jax.ShapeDtypeStruct((nd_pad, OUT_DIMS), jnp.float32),
        grid=(n_tiles,),
        in_specs=in_specs,
        out_specs=out_spec,
        compiler_params=pltpu.CompilerParams(
            dimension_semantics=("parallel",),          # megacore-shardable on v7x
            vmem_limit_bytes=32 * 1024 * 1024,          # explicit budget (safe on v5e/v6e/v7x)
        ),
        cost_estimate=pl.CostEstimate(
            flops=int(flops),
            transcendentals=int(e_rows * HEADS),
            bytes_accessed=int(bytes_accessed),
        ),
    )(*inputs)
    return out[:num_dst]


def reference_forward(params, src_x, dst_x, edge_index):
    """Pure-JAX reference mirroring torch / PyG GATv2Conv semantics (flat edge list)."""
    num_dst = dst_x.shape[0]
    src_idx, dst_idx = edge_index[0], edge_index[1]
    src_enc = jax.nn.relu(src_x @ params["w_src"] + params["b_src"][0])
    dst_enc = jax.nn.relu(dst_x @ params["w_dst"] + params["b_dst"][0])
    x_l = (src_enc @ params["w_l"] + params["b_l"][0]).reshape(-1, HEADS, HIDDEN)
    x_r = (dst_enc @ params["w_r"] + params["b_r"][0]).reshape(-1, HEADS, HIDDEN)
    x = x_l[src_idx] + x_r[dst_idx]
    x = jnp.where(x > 0, x, NEG_SLOPE * x)
    att = params["att"][0].reshape(HEADS, HIDDEN)
    score = (x * att).sum(-1)                                                # [E, H]
    m = jax.ops.segment_max(score, dst_idx, num_segments=num_dst)
    p = jnp.exp(score - m[dst_idx])
    denom = jax.ops.segment_sum(p, dst_idx, num_segments=num_dst)
    alpha = p / denom[dst_idx]
    msg = x_l[src_idx] * alpha[:, :, None]
    conv = jax.ops.segment_sum(msg, dst_idx, num_segments=num_dst).reshape(num_dst, HEADS * HIDDEN)
    conv = jax.nn.relu(conv + params["conv_bias"][0])
    feat = jnp.concatenate([dst_enc, conv], axis=-1)
    w1 = jnp.concatenate([params["w1a"], params["w1b"]], axis=0)
    h1 = jax.nn.relu(feat @ w1 + params["b1"][0])
    return h1 @ params["w2"] + params["b2"][0]


if __name__ == "__main__":
    key = jax.random.PRNGKey(0)
    k_par, k_src, k_dst = jax.random.split(key, 3)

    # small batch consistent with collate_batch: 37 ego vehicles (dst), 3 other vehicles each (src),
    # edge_index = [arange(N_src), repeat(dst_idx)].  37 is deliberately not a multiple of the tile
    # so the padding path and a multi-step grid are both exercised.
    n_dst, per_dst = 37, 3
    n_src = n_dst * per_dst
    dst_x = jax.random.normal(k_dst, (n_dst, GRAPH_DST_DIMS), dtype=jnp.float32)
    src_x = jax.random.normal(k_src, (n_src, GRAPH_SRC_DIMS), dtype=jnp.float32)
    edge_index = np.stack([np.arange(n_src, dtype=np.int32),
                           np.repeat(np.arange(n_dst, dtype=np.int32), per_dst)])

    params = make_params(k_par)
    src_dense, edge_mask = densify_edges(src_x, edge_index, n_dst)

    ref = reference_forward(params, src_x, dst_x, edge_index)

    # f32 path (tight check)
    out = standard_rl_forward(params, dst_x, src_dense, edge_mask, tile_nd=16)
    out = jax.block_until_ready(out)
    np.testing.assert_allclose(np.asarray(out), np.asarray(ref), rtol=1e-4, atol=1e-4)

    # bf16-streamed path (v6e/v7x HBM-traffic optimization); f32 accumulation, loose tolerance.
    out_bf16 = standard_rl_forward(params, dst_x, src_dense, edge_mask, tile_nd=16, use_bf16=True)
    out_bf16 = jax.block_until_ready(out_bf16)
    np.testing.assert_allclose(np.asarray(out_bf16), np.asarray(ref), rtol=5e-2, atol=5e-2)

    print("KERNEL_OK")
</pallas_src>

<mosaic_0001>
module attributes {stable_mosaic.version = 11 : i64} {
  func.func @standard_rl_kernel(%arg0: i32, %arg1: memref<16x27xf32, #tpu.memory_space<vmem>>, %arg2: memref<3x16x23xf32, #tpu.memory_space<vmem>>, %arg3: memref<3x16x1xf32, #tpu.memory_space<vmem>>, %arg4: memref<23x16xf32, #tpu.memory_space<vmem>>, %arg5: memref<1x16xf32, #tpu.memory_space<vmem>>, %arg6: memref<27x16xf32, #tpu.memory_space<vmem>>, %arg7: memref<1x16xf32, #tpu.memory_space<vmem>>, %arg8: memref<16x80xf32, #tpu.memory_space<vmem>>, %arg9: memref<1x80xf32, #tpu.memory_space<vmem>>, %arg10: memref<16x80xf32, #tpu.memory_space<vmem>>, %arg11: memref<1x80xf32, #tpu.memory_space<vmem>>, %arg12: memref<80x5xf32, #tpu.memory_space<vmem>>, %arg13: memref<5x80xf32, #tpu.memory_space<vmem>>, %arg14: memref<1x80xf32, #tpu.memory_space<vmem>>, %arg15: memref<16x8xf32, #tpu.memory_space<vmem>>, %arg16: memref<80x8xf32, #tpu.memory_space<vmem>>, %arg17: memref<1x8xf32, #tpu.memory_space<vmem>>, %arg18: memref<8x3xf32, #tpu.memory_space<vmem>>, %arg19: memref<1x3xf32, #tpu.memory_space<vmem>>, %arg20: memref<16x3xf32, #tpu.memory_space<vmem>>) attributes {dimension_semantics = [#tpu.dimension_semantics<parallel>], iteration_bounds = array<i64: 3>, scalar_prefetch = 0 : i64, scratch_operands = 0 : i64, tpu.core_type = #tpu.core_type<tc>, window_params = [{transform_indices = @transform_0, window_bounds = array<i64: 16, 27>}, {transform_indices = @transform_1, window_bounds = array<i64: 3, 16, 23>}, {transform_indices = @transform_2, window_bounds = array<i64: 3, 16, 1>}, {pipeline_mode = #tpu.pipeline_mode<synchronous>, transform_indices = @transform_3, window_bounds = array<i64: 23, 16>}, {pipeline_mode = #tpu.pipeline_mode<synchronous>, transform_indices = @transform_4, window_bounds = array<i64: 1, 16>}, {pipeline_mode = #tpu.pipeline_mode<synchronous>, transform_indices = @transform_5, window_bounds = array<i64: 27, 16>}, {pipeline_mode = #tpu.pipeline_mode<synchronous>, transform_indices = @transform_6, window_bounds = array<i64: 1, 16>}, {pipeline_mode = #tpu.pipeline_mode<synchronous>, transform_indices = @transform_7, window_bounds = array<i64: 16, 80>}, {pipeline_mode = #tpu.pipeline_mode<synchronous>, transform_indices = @transform_8, window_bounds = array<i64: 1, 80>}, {pipeline_mode = #tpu.pipeline_mode<synchronous>, transform_indices = @transform_9, window_bounds = array<i64: 16, 80>}, {pipeline_mode = #tpu.pipeline_mode<synchronous>, transform_indices = @transform_10, window_bounds = array<i64: 1, 80>}, {pipeline_mode = #tpu.pipeline_mode<synchronous>, transform_indices = @transform_11, window_bounds = array<i64: 80, 5>}, {pipeline_mode = #tpu.pipeline_mode<synchronous>, transform_indices = @transform_12, window_bounds = array<i64: 5, 80>}, {pipeline_mode = #tpu.pipeline_mode<synchronous>, transform_indices = @transform_13, window_bounds = array<i64: 1, 80>}, {pipeline_mode = #tpu.pipeline_mode<synchronous>, transform_indices = @transform_14, window_bounds = array<i64: 16, 8>}, {pipeline_mode = #tpu.pipeline_mode<synchronous>, transform_indices = @transform_15, window_bounds = array<i64: 80, 8>}, {pipeline_mode = #tpu.pipeline_mode<synchronous>, transform_indices = @transform_16, window_bounds = array<i64: 1, 8>}, {pipeline_mode = #tpu.pipeline_mode<synchronous>, transform_indices = @transform_17, window_bounds = array<i64: 8, 3>}, {pipeline_mode = #tpu.pipeline_mode<synchronous>, transform_indices = @transform_18, window_bounds = array<i64: 1, 3>}, {transform_indices = @transform_19, window_bounds = array<i64: 16, 3>}]} {
    %c0 = arith.constant 0 : index
    %c0_0 = arith.constant 0 : index
    %0 = vector.load %arg1[%c0, %c0_0] : memref<16x27xf32, #tpu.memory_space<vmem>>, vector<16x27xf32>
    %c0_1 = arith.constant 0 : index
    %c0_2 = arith.constant 0 : index
    %1 = vector.load %arg6[%c0_1, %c0_2] : memref<27x16xf32, #tpu.memory_space<vmem>>, vector<27x16xf32>
    %cst = arith.constant dense<0.000000e+00> : vector<16x16xf32>
    %2 = tpu.matmul %0, %1, %cst {dimension_numbers = #tpu.dot_dimension_numbers<[1], [0], [0], [1], [0, 0, 1, 1], [], []>} : vector<16x27xf32>, vector<27x16xf32>, vector<16x16xf32> -> vector<16x16xf32>
    %c0_3 = arith.constant 0 : index
    %c0_4 = arith.constant 0 : index
    %3 = vector.load %arg7[%c0_3, %c0_4] : memref<1x16xf32, #tpu.memory_space<vmem>>, vector<1x16xf32>
    %4 = vector.broadcast %3 : vector<1x16xf32> to vector<16x16xf32>
    %5 = arith.addf %2, %4 : vector<16x16xf32>
    %cst_5 = arith.constant 0.000000e+00 : f32
    %6 = vector.broadcast %cst_5 : f32 to vector<16x16xf32>
    %7 = arith.maximumf %5, %6 : vector<16x16xf32>
    %c0_6 = arith.constant 0 : index
    %c0_7 = arith.constant 0 : index
    %8 = vector.load %arg10[%c0_6, %c0_7] : memref<16x80xf32, #tpu.memory_space<vmem>>, vector<16x80xf32>
    %cst_8 = arith.constant dense<0.000000e+00> : vector<16x80xf32>
    %9 = tpu.matmul %7, %8, %cst_8 {dimension_numbers = #tpu.dot_dimension_numbers<[1], [0], [0], [1], [0, 0, 1, 1], [], []>} : vector<16x16xf32>, vector<16x80xf32>, vector<16x80xf32> -> vector<16x80xf32>
    %c0_9 = arith.constant 0 : index
    %c0_10 = arith.constant 0 : index
    %10 = vector.load %arg11[%c0_9, %c0_10] : memref<1x80xf32, #tpu.memory_space<vmem>>, vector<1x80xf32>
    %11 = vector.broadcast %10 : vector<1x80xf32> to vector<16x80xf32>
    %12 = arith.addf %9, %11 : vector<16x80xf32>
    %c0_11 = arith.constant 0 : index
    %c0_12 = arith.constant 0 : index
    %c0_13 = arith.constant 0 : index
    %13 = vector.load %arg2[%c0_11, %c0_12, %c0_13] : memref<3x16x23xf32, #tpu.memory_space<vmem>>, vector<1x16x23xf32>
    %14 = vector.shape_cast %13 : vector<1x16x23xf32> to vector<16x23xf32>
    %c0_14 = arith.constant 0 : index
    %c0_15 = arith.constant 0 : index
    %15 = vector.load %arg4[%c0_14, %c0_15] : memref<23x16xf32, #tpu.memory_space<vmem>>, vector<23x16xf32>
    %cst_16 = arith.constant dense<0.000000e+00> : vector<16x16xf32>
    %16 = tpu.matmul %14, %15, %cst_16 {dimension_numbers = #tpu.dot_dimension_numbers<[1], [0], [0], [1], [0, 0, 1, 1], [], []>} : vector<16x23xf32>, vector<23x16xf32>, vector<16x16xf32> -> vector<16x16xf32>
    %c0_17 = arith.constant 0 : index
    %c0_18 = arith.constant 0 : index
    %17 = vector.load %arg5[%c0_17, %c0_18] : memref<1x16xf32, #tpu.memory_space<vmem>>, vector<1x16xf32>
    %18 = vector.broadcast %17 : vector<1x16xf32> to vector<16x16xf32>
    %19 = arith.addf %16, %18 : vector<16x16xf32>
    %cst_19 = arith.constant 0.000000e+00 : f32
    %20 = vector.broadcast %cst_19 : f32 to vector<16x16xf32>
    %21 = arith.maximumf %19, %20 : vector<16x16xf32>
    %c0_20 = arith.constant 0 : index
    %c0_21 = arith.constant 0 : index
    %22 = vector.load %arg8[%c0_20, %c0_21] : memref<16x80xf32, #tpu.memory_space<vmem>>, vector<16x80xf32>
    %cst_22 = arith.constant dense<0.000000e+00> : vector<16x80xf32>
    %23 = tpu.matmul %21, %22, %cst_22 {dimension_numbers = #tpu.dot_dimension_numbers<[1], [0], [0], [1], [0, 0, 1, 1], [], []>} : vector<16x16xf32>, vector<16x80xf32>, vector<16x80xf32> -> vector<16x80xf32>
    %c0_23 = arith.constant 0 : index
    %c0_24 = arith.constant 0 : index
    %24 = vector.load %arg9[%c0_23, %c0_24] : memref<1x80xf32, #tpu.memory_space<vmem>>, vector<1x80xf32>
    %25 = vector.broadcast %24 : vector<1x80xf32> to vector<16x80xf32>
    %26 = arith.addf %23, %25 : vector<16x80xf32>
    %27 = arith.addf %26, %12 : vector<16x80xf32>
    %cst_25 = arith.constant 0.000000e+00 : f32
    %28 = vector.broadcast %cst_25 : f32 to vector<16x80xf32>
    %29 = arith.cmpf ogt, %27, %28 : vector<16x80xf32>
    %cst_26 = arith.constant 2.000000e-01 : f32
    %30 = vector.broadcast %cst_26 : f32 to vector<16x80xf32>
    %31 = arith.mulf %30, %27 : vector<16x80xf32>
    %32 = arith.select %29, %27, %31 : vector<16x80xi1>, vector<16x80xf32>
    %c0_27 = arith.constant 0 : index
    %c0_28 = arith.constant 0 : index
    %33 = vector.load %arg12[%c0_27, %c0_28] : memref<80x5xf32, #tpu.memory_space<vmem>>, vector<80x5xf32>
    %cst_29 = arith.constant dense<0.000000e+00> : vector<16x5xf32>
    %34 = tpu.matmul %32, %33, %cst_29 {dimension_numbers = #tpu.dot_dimension_numbers<[1], [0], [0], [1], [0, 0, 1, 1], [], []>} : vector<16x80xf32>, vector<80x5xf32>, vector<16x5xf32> -> vector<16x5xf32>
    %c0_30 = arith.constant 0 : index
    %c0_31 = arith.constant 0 : index
    %c0_32 = arith.constant 0 : index
    %35 = vector.load %arg3[%c0_30, %c0_31, %c0_32] : memref<3x16x1xf32, #tpu.memory_space<vmem>>, vector<1x16x1xf32>
    %36 = vector.shape_cast %35 : vector<1x16x1xf32> to vector<16x1xf32>
    %cst_33 = arith.constant 0.000000e+00 : f32
    %37 = vector.broadcast %cst_33 : f32 to vector<16x1xf32>
    %38 = arith.cmpf ogt, %36, %37 : vector<16x1xf32>
    %cst_34 = arith.constant -1.000000e+30 : f32
    %39 = vector.shape_cast %38 : vector<16x1xi1> to vector<16x1xi1>
    %40 = vector.broadcast %39 : vector<16x1xi1> to vector<16x5xi1>
    %41 = vector.broadcast %cst_34 : f32 to vector<16x5xf32>
    %42 = arith.select %40, %34, %41 : vector<16x5xi1>, vector<16x5xf32>
    %c1 = arith.constant 1 : index
    %c0_35 = arith.constant 0 : index
    %c0_36 = arith.constant 0 : index
    %43 = vector.load %arg2[%c1, %c0_35, %c0_36] : memref<3x16x23xf32, #tpu.memory_space<vmem>>, vector<1x16x23xf32>
    %44 = vector.shape_cast %43 : vector<1x16x23xf32> to vector<16x23xf32>
    %c0_37 = arith.constant 0 : index
    %c0_38 = arith.constant 0 : index
    %45 = vector.load %arg4[%c0_37, %c0_38] : memref<23x16xf32, #tpu.memory_space<vmem>>, vector<23x16xf32>
    %cst_39 = arith.constant dense<0.000000e+00> : vector<16x16xf32>
    %46 = tpu.matmul %44, %45, %cst_39 {dimension_numbers = #tpu.dot_dimension_numbers<[1], [0], [0], [1], [0, 0, 1, 1], [], []>} : vector<16x23xf32>, vector<23x16xf32>, vector<16x16xf32> -> vector<16x16xf32>
    %c0_40 = arith.constant 0 : index
    %c0_41 = arith.constant 0 : index
    %47 = vector.load %arg5[%c0_40, %c0_41] : memref<1x16xf32, #tpu.memory_space<vmem>>, vector<1x16xf32>
    %48 = vector.broadcast %47 : vector<1x16xf32> to vector<16x16xf32>
    %49 = arith.addf %46, %48 : vector<16x16xf32>
    %cst_42 = arith.constant 0.000000e+00 : f32
    %50 = vector.broadcast %cst_42 : f32 to vector<16x16xf32>
    %51 = arith.maximumf %49, %50 : vector<16x16xf32>
    %c0_43 = arith.constant 0 : index
    %c0_44 = arith.constant 0 : index
    %52 = vector.load %arg8[%c0_43, %c0_44] : memref<16x80xf32, #tpu.memory_space<vmem>>, vector<16x80xf32>
    %cst_45 = arith.constant dense<0.000000e+00> : vector<16x80xf32>
    %53 = tpu.matmul %51, %52, %cst_45 {dimension_numbers = #tpu.dot_dimension_numbers<[1], [0], [0], [1], [0, 0, 1, 1], [], []>} : vector<16x16xf32>, vector<16x80xf32>, vector<16x80xf32> -> vector<16x80xf32>
    %c0_46 = arith.constant 0 : index
    %c0_47 = arith.constant 0 : index
    %54 = vector.load %arg9[%c0_46, %c0_47] : memref<1x80xf32, #tpu.memory_space<vmem>>, vector<1x80xf32>
    %55 = vector.broadcast %54 : vector<1x80xf32> to vector<16x80xf32>
    %56 = arith.addf %53, %55 : vector<16x80xf32>
    %57 = arith.addf %56, %12 : vector<16x80xf32>
    %cst_48 = arith.constant 0.000000e+00 : f32
    %58 = vector.broadcast %cst_48 : f32 to vector<16x80xf32>
    %59 = arith.cmpf ogt, %57, %58 : vector<16x80xf32>
    %cst_49 = arith.constant 2.000000e-01 : f32
    %60 = vector.broadcast %cst_49 : f32 to vector<16x80xf32>
    %61 = arith.mulf %60, %57 : vector<16x80xf32>
    %62 = arith.select %59, %57, %61 : vector<16x80xi1>, vector<16x80xf32>
    %c0_50 = arith.constant 0 : index
    %c0_51 = arith.constant 0 : index
    %63 = vector.load %arg12[%c0_50, %c0_51] : memref<80x5xf32, #tpu.memory_space<vmem>>, vector<80x5xf32>
    %cst_52 = arith.constant dense<0.000000e+00> : vector<16x5xf32>
    %64 = tpu.matmul %62, %63, %cst_52 {dimension_numbers = #tpu.dot_dimension_numbers<[1], [0], [0], [1], [0, 0, 1, 1], [], []>} : vector<16x80xf32>, vector<80x5xf32>, vector<16x5xf32> -> vector<16x5xf32>
    %c1_53 = arith.constant 1 : index
    %c0_54 = arith.constant 0 : index
    %c0_55 = arith.constant 0 : index
    %65 = vector.load %arg3[%c1_53, %c0_54, %c0_55] : memref<3x16x1xf32, #tpu.memory_space<vmem>>, vector<1x16x1xf32>
    %66 = vector.shape_cast %65 : vector<1x16x1xf32> to vector<16x1xf32>
    %cst_56 = arith.constant 0.000000e+00 : f32
    %67 = vector.broadcast %cst_56 : f32 to vector<16x1xf32>
    %68 = arith.cmpf ogt, %66, %67 : vector<16x1xf32>
    %cst_57 = arith.constant -1.000000e+30 : f32
    %69 = vector.shape_cast %68 : vector<16x1xi1> to vector<16x1xi1>
    %70 = vector.broadcast %69 : vector<16x1xi1> to vector<16x5xi1>
    %71 = vector.broadcast %cst_57 : f32 to vector<16x5xf32>
    %72 = arith.select %70, %64, %71 : vector<16x5xi1>, vector<16x5xf32>
    %c2 = arith.constant 2 : index
    %c0_58 = arith.constant 0 : index
    %c0_59 = arith.constant 0 : index
    %73 = vector.load %arg2[%c2, %c0_58, %c0_59] : memref<3x16x23xf32, #tpu.memory_space<vmem>>, vector<1x16x23xf32>
    %74 = vector.shape_cast %73 : vector<1x16x23xf32> to vector<16x23xf32>
    %c0_60 = arith.constant 0 : index
    %c0_61 = arith.constant 0 : index
    %75 = vector.load %arg4[%c0_60, %c0_61] : memref<23x16xf32, #tpu.memory_space<vmem>>, vector<23x16xf32>
    %cst_62 = arith.constant dense<0.000000e+00> : vector<16x16xf32>
    %76 = tpu.matmul %74, %75, %cst_62 {dimension_numbers = #tpu.dot_dimension_numbers<[1], [0], [0], [1], [0, 0, 1, 1], [], []>} : vector<16x23xf32>, vector<23x16xf32>, vector<16x16xf32> -> vector<16x16xf32>
    %c0_63 = arith.constant 0 : index
    %c0_64 = arith.constant 0 : index
    %77 = vector.load %arg5[%c0_63, %c0_64] : memref<1x16xf32, #tpu.memory_space<vmem>>, vector<1x16xf32>
    %78 = vector.broadcast %77 : vector<1x16xf32> to vector<16x16xf32>
    %79 = arith.addf %76, %78 : vector<16x16xf32>
    %cst_65 = arith.constant 0.000000e+00 : f32
    %80 = vector.broadcast %cst_65 : f32 to vector<16x16xf32>
    %81 = arith.maximumf %79, %80 : vector<16x16xf32>
    %c0_66 = arith.constant 0 : index
    %c0_67 = arith.constant 0 : index
    %82 = vector.load %arg8[%c0_66, %c0_67] : memref<16x80xf32, #tpu.memory_space<vmem>>, vector<16x80xf32>
    %cst_68 = arith.constant dense<0.000000e+00> : vector<16x80xf32>
    %83 = tpu.matmul %81, %82, %cst_68 {dimension_numbers = #tpu.dot_dimension_numbers<[1], [0], [0], [1], [0, 0, 1, 1], [], []>} : vector<16x16xf32>, vector<16x80xf32>, vector<16x80xf32> -> vector<16x80xf32>
    %c0_69 = arith.constant 0 : index
    %c0_70 = arith.constant 0 : index
    %84 = vector.load %arg9[%c0_69, %c0_70] : memref<1x80xf32, #tpu.memory_space<vmem>>, vector<1x80xf32>
    %85 = vector.broadcast %84 : vector<1x80xf32> to vector<16x80xf32>
    %86 = arith.addf %83, %85 : vector<16x80xf32>
    %87 = arith.addf %86, %12 : vector<16x80xf32>
    %cst_71 = arith.constant 0.000000e+00 : f32
    %88 = vector.broadcast %cst_71 : f32 to vector<16x80xf32>
    %89 = arith.cmpf ogt, %87, %88 : vector<16x80xf32>
    %cst_72 = arith.constant 2.000000e-01 : f32
    %90 = vector.broadcast %cst_72 : f32 to vector<16x80xf32>
    %91 = arith.mulf %90, %87 : vector<16x80xf32>
    %92 = arith.select %89, %87, %91 : vector<16x80xi1>, vector<16x80xf32>
    %c0_73 = arith.constant 0 : index
    %c0_74 = arith.constant 0 : index
    %93 = vector.load %arg12[%c0_73, %c0_74] : memref<80x5xf32, #tpu.memory_space<vmem>>, vector<80x5xf32>
    %cst_75 = arith.constant dense<0.000000e+00> : vector<16x5xf32>
    %94 = tpu.matmul %92, %93, %cst_75 {dimension_numbers = #tpu.dot_dimension_numbers<[1], [0], [0], [1], [0, 0, 1, 1], [], []>} : vector<16x80xf32>, vector<80x5xf32>, vector<16x5xf32> -> vector<16x5xf32>
    %c2_76 = arith.constant 2 : index
    %c0_77 = arith.constant 0 : index
    %c0_78 = arith.constant 0 : index
    %95 = vector.load %arg3[%c2_76, %c0_77, %c0_78] : memref<3x16x1xf32, #tpu.memory_space<vmem>>, vector<1x16x1xf32>
    %96 = vector.shape_cast %95 : vector<1x16x1xf32> to vector<16x1xf32>
    %cst_79 = arith.constant 0.000000e+00 : f32
    %97 = vector.broadcast %cst_79 : f32 to vector<16x1xf32>
    %98 = arith.cmpf ogt, %96, %97 : vector<16x1xf32>
    %cst_80 = arith.constant -1.000000e+30 : f32
    %99 = vector.shape_cast %98 : vector<16x1xi1> to vector<16x1xi1>
    %100 = vector.broadcast %99 : vector<16x1xi1> to vector<16x5xi1>
    %101 = vector.broadcast %cst_80 : f32 to vector<16x5xf32>
    %102 = arith.select %100, %94, %101 : vector<16x5xi1>, vector<16x5xf32>
    %103 = arith.maximumf %42, %72 : vector<16x5xf32>
    %104 = arith.maximumf %103, %102 : vector<16x5xf32>
    %105 = arith.subf %42, %104 : vector<16x5xf32>
    %106 = math.exp %105 : vector<16x5xf32>
    %c0_81 = arith.constant 0 : index
    %c0_82 = arith.constant 0 : index
    %c0_83 = arith.constant 0 : index
    %107 = vector.load %arg3[%c0_81, %c0_82, %c0_83] : memref<3x16x1xf32, #tpu.memory_space<vmem>>, vector<1x16x1xf32>
    %108 = vector.shape_cast %107 : vector<1x16x1xf32> to vector<16x1xf32>
    %109 = vector.broadcast %108 : vector<16x1xf32> to vector<16x5xf32>
    %110 = arith.mulf %106, %109 : vector<16x5xf32>
    %111 = arith.subf %72, %104 : vector<16x5xf32>
    %112 = math.exp %111 : vector<16x5xf32>
    %c1_84 = arith.constant 1 : index
    %c0_85 = arith.constant 0 : index
    %c0_86 = arith.constant 0 : index
    %113 = vector.load %arg3[%c1_84, %c0_85, %c0_86] : memref<3x16x1xf32, #tpu.memory_space<vmem>>, vector<1x16x1xf32>
    %114 = vector.shape_cast %113 : vector<1x16x1xf32> to vector<16x1xf32>
    %115 = vector.broadcast %114 : vector<16x1xf32> to vector<16x5xf32>
    %116 = arith.mulf %112, %115 : vector<16x5xf32>
    %117 = arith.subf %102, %104 : vector<16x5xf32>
    %118 = math.exp %117 : vector<16x5xf32>
    %c2_87 = arith.constant 2 : index
    %c0_88 = arith.constant 0 : index
    %c0_89 = arith.constant 0 : index
    %119 = vector.load %arg3[%c2_87, %c0_88, %c0_89] : memref<3x16x1xf32, #tpu.memory_space<vmem>>, vector<1x16x1xf32>
    %120 = vector.shape_cast %119 : vector<1x16x1xf32> to vector<16x1xf32>
    %121 = vector.broadcast %120 : vector<16x1xf32> to vector<16x5xf32>
    %122 = arith.mulf %118, %121 : vector<16x5xf32>
    %123 = arith.addf %110, %116 : vector<16x5xf32>
    %124 = arith.addf %123, %122 : vector<16x5xf32>
    %cst_90 = arith.constant 1.000000e-30 : f32
    %125 = vector.broadcast %cst_90 : f32 to vector<16x5xf32>
    %126 = arith.maximumf %124, %125 : vector<16x5xf32>
    %cst_91 = arith.constant 1.000000e+00 : f32
    %127 = vector.broadcast %cst_91 : f32 to vector<16x5xf32>
    %128 = arith.divf %127, %126 : vector<16x5xf32>
    %129 = arith.mulf %110, %128 : vector<16x5xf32>
    %c0_92 = arith.constant 0 : index
    %c0_93 = arith.constant 0 : index
    %130 = vector.load %arg13[%c0_92, %c0_93] : memref<5x80xf32, #tpu.memory_space<vmem>>, vector<5x80xf32>
    %cst_94 = arith.constant dense<0.000000e+00> : vector<16x80xf32>
    %131 = tpu.matmul %129, %130, %cst_94 {dimension_numbers = #tpu.dot_dimension_numbers<[1], [0], [0], [1], [0, 0, 1, 1], [], []>} : vector<16x5xf32>, vector<5x80xf32>, vector<16x80xf32> -> vector<16x80xf32>
    %132 = arith.mulf %131, %26 : vector<16x80xf32>
    %133 = arith.mulf %116, %128 : vector<16x5xf32>
    %c0_95 = arith.constant 0 : index
    %c0_96 = arith.constant 0 : index
    %134 = vector.load %arg13[%c0_95, %c0_96] : memref<5x80xf32, #tpu.memory_space<vmem>>, vector<5x80xf32>
    %cst_97 = arith.constant dense<0.000000e+00> : vector<16x80xf32>
    %135 = tpu.matmul %133, %134, %cst_97 {dimension_numbers = #tpu.dot_dimension_numbers<[1], [0], [0], [1], [0, 0, 1, 1], [], []>} : vector<16x5xf32>, vector<5x80xf32>, vector<16x80xf32> -> vector<16x80xf32>
    %136 = arith.mulf %135, %56 : vector<16x80xf32>
    %137 = arith.addf %132, %136 : vector<16x80xf32>
    %138 = arith.mulf %122, %128 : vector<16x5xf32>
    %c0_98 = arith.constant 0 : index
    %c0_99 = arith.constant 0 : index
    %139 = vector.load %arg13[%c0_98, %c0_99] : memref<5x80xf32, #tpu.memory_space<vmem>>, vector<5x80xf32>
    %cst_100 = arith.constant dense<0.000000e+00> : vector<16x80xf32>
    %140 = tpu.matmul %138, %139, %cst_100 {dimension_numbers = #tpu.dot_dimension_numbers<[1], [0], [0], [1], [0, 0, 1, 1], [], []>} : vector<16x5xf32>, vector<5x80xf32>, vector<16x80xf32> -> vector<16x80xf32>
    %141 = arith.mulf %140, %86 : vector<16x80xf32>
    %142 = arith.addf %137, %141 : vector<16x80xf32>
    %c0_101 = arith.constant 0 : index
    %c0_102 = arith.constant 0 : index
    %143 = vector.load %arg14[%c0_101, %c0_102] : memref<1x80xf32, #tpu.memory_space<vmem>>, vector<1x80xf32>
    %144 = vector.broadcast %143 : vector<1x80xf32> to vector<16x80xf32>
    %145 = arith.addf %142, %144 : vector<16x80xf32>
    %cst_103 = arith.constant 0.000000e+00 : f32
    %146 = vector.broadcast %cst_103 : f32 to vector<16x80xf32>
    %147 = arith.maximumf %145, %146 : vector<16x80xf32>
    %c0_104 = arith.constant 0 : index
    %c0_105 = arith.constant 0 : index
    %148 = vector.load %arg15[%c0_104, %c0_105] : memref<16x8xf32, #tpu.memory_space<vmem>>, vector<16x8xf32>
    %cst_106 = arith.constant dense<0.000000e+00> : vector<16x8xf32>
    %149 = tpu.matmul %7, %148, %cst_106 {dimension_numbers = #tpu.dot_dimension_numbers<[1], [0], [0], [1], [0, 0, 1, 1], [], []>} : vector<16x16xf32>, vector<16x8xf32>, vector<16x8xf32> -> vector<16x8xf32>
    %c0_107 = arith.constant 0 : index
    %c0_108 = arith.constant 0 : index
    %150 = vector.load %arg16[%c0_107, %c0_108] : memref<80x8xf32, #tpu.memory_space<vmem>>, vector<80x8xf32>
    %cst_109 = arith.constant dense<0.000000e+00> : vector<16x8xf32>
    %151 = tpu.matmul %147, %150, %cst_109 {dimension_numbers = #tpu.dot_dimension_numbers<[1], [0], [0], [1], [0, 0, 1, 1], [], []>} : vector<16x80xf32>, vector<80x8xf32>, vector<16x8xf32> -> vector<16x8xf32>
    %152 = arith.addf %149, %151 : vector<16x8xf32>
    %c0_110 = arith.constant 0 : index
    %c0_111 = arith.constant 0 : index
    %153 = vector.load %arg17[%c0_110, %c0_111] : memref<1x8xf32, #tpu.memory_space<vmem>>, vector<1x8xf32>
    %154 = vector.broadcast %153 : vector<1x8xf32> to vector<16x8xf32>
    %155 = arith.addf %152, %154 : vector<16x8xf32>
    %cst_112 = arith.constant 0.000000e+00 : f32
    %156 = vector.broadcast %cst_112 : f32 to vector<16x8xf32>
    %157 = arith.maximumf %155, %156 : vector<16x8xf32>
    %c0_113 = arith.constant 0 : index
    %c0_114 = arith.constant 0 : index
    %158 = vector.load %arg18[%c0_113, %c0_114] : memref<8x3xf32, #tpu.memory_space<vmem>>, vector<8x3xf32>
    %cst_115 = arith.constant dense<0.000000e+00> : vector<16x3xf32>
    %159 = tpu.matmul %157, %158, %cst_115 {dimension_numbers = #tpu.dot_dimension_numbers<[1], [0], [0], [1], [0, 0, 1, 1], [], []>} : vector<16x8xf32>, vector<8x3xf32>, vector<16x3xf32> -> vector<16x3xf32>
    %c0_116 = arith.constant 0 : index
    %c0_117 = arith.constant 0 : index
    %160 = vector.load %arg19[%c0_116, %c0_117] : memref<1x3xf32, #tpu.memory_space<vmem>>, vector<1x3xf32>
    %161 = vector.broadcast %160 : vector<1x3xf32> to vector<16x3xf32>
    %162 = arith.addf %159, %161 : vector<16x3xf32>
    %c0_118 = arith.constant 0 : index
    %c0_119 = arith.constant 0 : index
    %163 = vector.load %arg20[%c0_118, %c0_119] : memref<16x3xf32, #tpu.memory_space<vmem>>, vector<16x3xf32>
    tpu.vector_store %arg20[%c0_118, %c0_119], %162 {strides = array<i32>} : memref<16x3xf32, #tpu.memory_space<vmem>>, vector<16x3xf32>,
    return
  }
  func.func @transform_0(%arg0: i32) -> (i32, i32) {
    %c0_i32 = arith.constant 0 : i32
    %c0_i32_0 = arith.constant 0 : i32
    return %arg0, %c0_i32 : i32, i32
  }
  func.func @transform_1(%arg0: i32) -> (i32, i32, i32) {
    %c0_i32 = arith.constant 0 : i32
    %c0_i32_0 = arith.constant 0 : i32
    %c0_i32_1 = arith.constant 0 : i32
    return %c0_i32, %arg0, %c0_i32_0 : i32, i32, i32
  }
  func.func @transform_2(%arg0: i32) -> (i32, i32, i32) {
    %c0_i32 = arith.constant 0 : i32
    %c0_i32_0 = arith.constant 0 : i32
    %c0_i32_1 = arith.constant 0 : i32
    return %c0_i32, %arg0, %c0_i32_0 : i32, i32, i32
  }
  func.func @transform_3(%arg0: i32) -> (i32, i32) {
    %c0_i32 = arith.constant 0 : i32
    %c0_i32_0 = arith.constant 0 : i32
    %c0_i32_1 = arith.constant 0 : i32
    return %c0_i32, %c0_i32_0 : i32, i32
  }
  func.func @transform_4(%arg0: i32) -> (i32, i32) {
    %c0_i32 = arith.constant 0 : i32
    %c0_i32_0 = arith.constant 0 : i32
    %c0_i32_1 = arith.constant 0 : i32
    return %c0_i32, %c0_i32_0 : i32, i32
  }
  func.func @transform_5(%arg0: i32) -> (i32, i32) {
    %c0_i32 = arith.constant 0 : i32
    %c0_i32_0 = arith.constant 0 : i32
    %c0_i32_1 = arith.constant 0 : i32
    return %c0_i32, %c0_i32_0 : i32, i32
  }
  func.func @transform_6(%arg0: i32) -> (i32, i32) {
    %c0_i32 = arith.constant 0 : i32
    %c0_i32_0 = arith.constant 0 : i32
    %c0_i32_1 = arith.constant 0 : i32
    return %c0_i32, %c0_i32_0 : i32, i32
  }
  func.func @transform_7(%arg0: i32) -> (i32, i32) {
    %c0_i32 = arith.constant 0 : i32
    %c0_i32_0 = arith.constant 0 : i32
    %c0_i32_1 = arith.constant 0 : i32
    return %c0_i32, %c0_i32_0 : i32, i32
  }
  func.func @transform_8(%arg0: i32) -> (i32, i32) {
    %c0_i32 = arith.constant 0 : i32
    %c0_i32_0 = arith.constant 0 : i32
    %c0_i32_1 = arith.constant 0 : i32
    return %c0_i32, %c0_i32_0 : i32, i32
  }
  func.func @transform_9(%arg0: i32) -> (i32, i32) {
    %c0_i32 = arith.constant 0 : i32
    %c0_i32_0 = arith.constant 0 : i32
    %c0_i32_1 = arith.constant 0 : i32
    return %c0_i32, %c0_i32_0 : i32, i32
  }
  func.func @transform_10(%arg0: i32) -> (i32, i32) {
    %c0_i32 = arith.constant 0 : i32
    %c0_i32_0 = arith.constant 0 : i32
    %c0_i32_1 = arith.constant 0 : i32
    return %c0_i32, %c0_i32_0 : i32, i32
  }
  func.func @transform_11(%arg0: i32) -> (i32, i32) {
    %c0_i32 = arith.constant 0 : i32
    %c0_i32_0 = arith.constant 0 : i32
    %c0_i32_1 = arith.constant 0 : i32
    return %c0_i32, %c0_i32_0 : i32, i32
  }
  func.func @transform_12(%arg0: i32) -> (i32, i32) {
    %c0_i32 = arith.constant 0 : i32
    %c0_i32_0 = arith.constant 0 : i32
    %c0_i32_1 = arith.constant 0 : i32
    return %c0_i32, %c0_i32_0 : i32, i32
  }
  func.func @transform_13(%arg0: i32) -> (i32, i32) {
    %c0_i32 = arith.constant 0 : i32
    %c0_i32_0 = arith.constant 0 : i32
    %c0_i32_1 = arith.constant 0 : i32
    return %c0_i32, %c0_i32_0 : i32, i32
  }
  func.func @transform_14(%arg0: i32) -> (i32, i32) {
    %c0_i32 = arith.constant 0 : i32
    %c0_i32_0 = arith.constant 0 : i32
    %c0_i32_1 = arith.constant 0 : i32
    return %c0_i32, %c0_i32_0 : i32, i32
  }
  func.func @transform_15(%arg0: i32) -> (i32, i32) {
    %c0_i32 = arith.constant 0 : i32
    %c0_i32_0 = arith.constant 0 : i32
    %c0_i32_1 = arith.constant 0 : i32
    return %c0_i32, %c0_i32_0 : i32, i32
  }
  func.func @transform_16(%arg0: i32) -> (i32, i32) {
    %c0_i32 = arith.constant 0 : i32
    %c0_i32_0 = arith.constant 0 : i32
    %c0_i32_1 = arith.constant 0 : i32
    return %c0_i32, %c0_i32_0 : i32, i32
  }
  func.func @transform_17(%arg0: i32) -> (i32, i32) {
    %c0_i32 = arith.constant 0 : i32
    %c0_i32_0 = arith.constant 0 : i32
    %c0_i32_1 = arith.constant 0 : i32
    return %c0_i32, %c0_i32_0 : i32, i32
  }
  func.func @transform_18(%arg0: i32) -> (i32, i32) {
    %c0_i32 = arith.constant 0 : i32
    %c0_i32_0 = arith.constant 0 : i32
    %c0_i32_1 = arith.constant 0 : i32
    return %c0_i32, %c0_i32_0 : i32, i32
  }
  func.func @transform_19(%arg0: i32) -> (i32, i32) {
    %c0_i32 = arith.constant 0 : i32
    %c0_i32_0 = arith.constant 0 : i32
    return %arg0, %c0_i32 : i32, i32
  }
}

</mosaic_0001>

<llo_original>
// kernel: tpu_custom_call.1
$region0: #{tpu_custom_call.1}
  #allocation0 [shape = 'u32[]', space=smem, size = 0x4, offset = 0x4, fixed_abs, tag = 'smem constant byte address 0x4 - core index']
  #allocation1 [shape = 'u32[144,128]{1,0:T(1,128)}', space=vmem, size = 0x12000, scoped, tag = 'internal scratch']
  %s0 = inlined_call_operand.vmem [shape: f32[48,27], index: 0, kind: input, shape index: {}]
  %s1 = inlined_call_operand.vmem [shape: f32[3,48,23], index: 1, kind: input, shape index: {}]
  %s2 = inlined_call_operand.vmem [shape: f32[3,48,1], index: 2, kind: input, shape index: {}]
  %s3 = inlined_call_operand.vmem [shape: f32[23,16], index: 3, kind: input, shape index: {}]
  %s4 = inlined_call_operand.vmem [shape: f32[1,16], index: 4, kind: input, shape index: {}]
  %s5 = inlined_call_operand.vmem [shape: f32[27,16], index: 5, kind: input, shape index: {}]
  %s6 = inlined_call_operand.vmem [shape: f32[1,16], index: 6, kind: input, shape index: {}]
  %s7 = inlined_call_operand.vmem [shape: f32[16,80], index: 7, kind: input, shape index: {}]
  %s8 = inlined_call_operand.vmem [shape: f32[1,80], index: 8, kind: input, shape index: {}]
  %s9 = inlined_call_operand.vmem [shape: f32[16,80], index: 9, kind: input, shape index: {}]
  %s10 = inlined_call_operand.vmem [shape: f32[1,80], index: 10, kind: input, shape index: {}]
  %s11 = inlined_call_operand.vmem [shape: f32[80,5], index: 11, kind: input, shape index: {}]
  %s12 = inlined_call_operand.vmem [shape: f32[5,80], index: 12, kind: input, shape index: {}]
  %s13 = inlined_call_operand.vmem [shape: f32[1,80], index: 13, kind: input, shape index: {}]
  %s14 = inlined_call_operand.vmem [shape: f32[16,8], index: 14, kind: input, shape index: {}]
  %s15 = inlined_call_operand.vmem [shape: f32[80,8], index: 15, kind: input, shape index: {}]
  %s16 = inlined_call_operand.vmem [shape: f32[1,8], index: 16, kind: input, shape index: {}]
  %s17 = inlined_call_operand.vmem [shape: f32[8,3], index: 17, kind: input, shape index: {}]
  %s18 = inlined_call_operand.vmem [shape: f32[1,3], index: 18, kind: input, shape index: {}]
  %s19 = inlined_call_operand.vmem [shape: f32[48,3], index: 19, kind: output, shape index: {}]
  %s20 = sld [smem:[#allocation0]]
  $region185: #{tpu_custom_call.1} parent=0
    _
  %s22 = ssub.s32 1, %s20
  %s23 = scalar_select 0, %s22, %s20
  $region1: #{tpu_custom_call.1} parent=0
    #allocation2 [shape = 'u8[49152]{0}', space=vmem, size = 0xc000, scoped, tag = 'input window, operand 1']
    #allocation3 [shape = 'u8[49152]{0}', space=vmem, size = 0xc000, scoped, tag = 'input window, operand 2']
    loop: start=0, step=1, limit=5
    $region2: #{tpu_custom_call.1} parent=1 // loop_pre_header
      _
    $region3: #{tpu_custom_call.1} parent=1 // loop_header
      %s25 = sphi 0, %s29
      %p26 = scmp.ge.s32.totalorder %s25, 5
      %s35 = sphi 0, %s37
      %s38 = sphi 0, %s35
      %s39 = sphi 0, %s38
      %s55 = sphi 0, %s39
      %s61 = sphi 0, %s63
      %s64 = sphi 0, %s61
      %s65 = sphi 0, %s64
      %s81 = sphi 0, %s65
      %s87 = sphi 0, %s89
      %s90 = sphi 0, %s87
      %s91 = sphi 0, %s90
      %s107 = sphi 0, %s91
      %s111 = sphi 0, %s111
      %s113 = sphi 0, %s111
      %s114 = sphi 0, %s113
      %s128 = sphi 0, %s114
      %s132 = sphi 0, %s132
      %s134 = sphi 0, %s132
      %s135 = sphi 0, %s134
      %s149 = sphi 0, %s135
      %s153 = sphi 0, %s153
      %s155 = sphi 0, %s153
      %s156 = sphi 0, %s155
      %s170 = sphi 0, %s156
      %s174 = sphi 0, %s174
      %s176 = sphi 0, %s174
      %s177 = sphi 0, %s176
      %s191 = sphi 0, %s177
      %s195 = sphi 0, %s195
      %s197 = sphi 0, %s195
      %s198 = sphi 0, %s197
      %s212 = sphi 0, %s198
      %s216 = sphi 0, %s216
      %s218 = sphi 0, %s216
      %s219 = sphi 0, %s218
      %s233 = sphi 0, %s219
      %s237 = sphi 0, %s237
      %s239 = sphi 0, %s237
      %s240 = sphi 0, %s239
      %s254 = sphi 0, %s240
      %s258 = sphi 0, %s258
      %s260 = sphi 0, %s258
      %s261 = sphi 0, %s260
      %s275 = sphi 0, %s261
      %s279 = sphi 0, %s279
      %s281 = sphi 0, %s279
      %s282 = sphi 0, %s281
      %s296 = sphi 0, %s282
      %s300 = sphi 0, %s300
      %s302 = sphi 0, %s300
      %s303 = sphi 0, %s302
      %s317 = sphi 0, %s303
      %s321 = sphi 0, %s321
      %s323 = sphi 0, %s321
      %s324 = sphi 0, %s323
      %s338 = sphi 0, %s324
      %s342 = sphi 0, %s342
      %s344 = sphi 0, %s342
      %s345 = sphi 0, %s344
      %s359 = sphi 0, %s345
      %s363 = sphi 0, %s363
      %s365 = sphi 0, %s363
      %s366 = sphi 0, %s365
      %s380 = sphi 0, %s366
      %s384 = sphi 0, %s384
      %s386 = sphi 0, %s384
      %s387 = sphi 0, %s386
      %s401 = sphi 0, %s387
      %s405 = sphi 0, %s405
      %s407 = sphi 0, %s405
      %s408 = sphi 0, %s407
      %s422 = sphi 0, %s408
      %s426 = sphi 0, %s426
      %s428 = sphi 0, %s426
      %s429 = sphi 0, %s428
      %s443 = sphi 0, %s429
      %s449 = sphi 0, %s451
      %s452 = sphi 0, %s449
      %s453 = sphi 0, %s452
      %s469 = sphi 0, %s453
    $region4: #{tpu_custom_call.1} parent=1 // loop_header_branch
      %28 = sbr.rel (%p26) target = $region8
    $region5: #{tpu_custom_call.1} parent=1 // loop_body
      %s30 = ssub.s32 %s25, 1
      %s31 = ssub.s32 %s25, 2
      %s32 = sadd.s32 %s25, 1
      %s33 = ssub.s32 %s25, %s32
      %p34 = scmp.eq.s32.totalorder %s33, 0
      %s36 = sadd.s32 %s35, 1
      %s37 = scalar_select %p34, %s35, %s36
      %p40 = pneg %p34
      %p41 = scmp.eq.s32.totalorder %s25, 2
      %p42 = por %p40, %p41
      %p43 = scmp.ne.s32.totalorder %s35, %s38
      %p44 = scmp.eq.s32.totalorder %s25, 0
      %p45 = por %p43, %p44
      %p46 = scmp.ne.s32.totalorder %s35, %s38
      %p47 = scmp.eq.s32.totalorder %s30, 2
      %p48 = por %p46, %p47
      %p49 = scmp.ne.s32.totalorder %s38, %s39
      %p50 = scmp.eq.s32.totalorder %s30, 0
      %p51 = por %p49, %p50
      %p52 = scmp.ne.s32.totalorder %s38, %s39
      %p53 = scmp.eq.s32.totalorder %s31, 2
      %p54 = por %p52, %p53
      %p56 = scmp.ne.s32.totalorder %s39, %s55
      %p57 = scmp.eq.s32.totalorder %s31, 0
      %p58 = por %p56, %p57
      %s59 = ssub.s32 %s25, %s32
      %p60 = scmp.eq.s32.totalorder %s59, 0
      %s62 = sadd.s32 %s61, 1
      %s63 = scalar_select %p60, %s61, %s62
      %p66 = pneg %p60
      %p67 = scmp.eq.s32.totalorder %s25, 2
      %p68 = por %p66, %p67
      %p69 = scmp.ne.s32.totalorder %s61, %s64
      %p70 = scmp.eq.s32.totalorder %s25, 0
      %p71 = por %p69, %p70
      %p72 = scmp.ne.s32.totalorder %s61, %s64
      %p73 = scmp.eq.s32.totalorder %s30, 2
      %p74 = por %p72, %p73
      %p75 = scmp.ne.s32.totalorder %s64, %s65
      %p76 = scmp.eq.s32.totalorder %s30, 0
      %p77 = por %p75, %p76
      %p78 = scmp.ne.s32.totalorder %s64, %s65
      %p79 = scmp.eq.s32.totalorder %s31, 2
      %p80 = por %p78, %p79
      %p82 = scmp.ne.s32.totalorder %s65, %s81
      %p83 = scmp.eq.s32.totalorder %s31, 0
      %p84 = por %p82, %p83
      %s85 = ssub.s32 %s25, %s32
      %p86 = scmp.eq.s32.totalorder %s85, 0
      %s88 = sadd.s32 %s87, 1
      %s89 = scalar_select %p86, %s87, %s88
      %p92 = pneg %p86
      %p93 = scmp.eq.s32.totalorder %s25, 2
      %p94 = por %p92, %p93
      %p95 = scmp.ne.s32.totalorder %s87, %s90
      %p96 = scmp.eq.s32.totalorder %s25, 0
      %p97 = por %p95, %p96
      %p98 = scmp.ne.s32.totalorder %s87, %s90
      %p99 = scmp.eq.s32.totalorder %s30, 2
      %p100 = por %p98, %p99
      %p101 = scmp.ne.s32.totalorder %s90, %s91
      %p102 = scmp.eq.s32.totalorder %s30, 0
      %p103 = por %p101, %p102
      %p104 = scmp.ne.s32.totalorder %s90, %s91
      %p105 = scmp.eq.s32.totalorder %s31, 2
      %p106 = por %p104, %p105
      %p108 = scmp.ne.s32.totalorder %s91, %s107
      %p109 = scmp.eq.s32.totalorder %s31, 0
      %p110 = por %p108, %p109
      %s112 = sadd.s32 %s111, 1
      %p115 = scmp.eq.s32.totalorder %s25, 2
      %p116 = scmp.ne.s32.totalorder %s111, %s113
      %p117 = scmp.eq.s32.totalorder %s25, 0
      %p118 = por %p116, %p117
      %p119 = scmp.ne.s32.totalorder %s111, %s113
      %p120 = scmp.eq.s32.totalorder %s30, 2
      %p121 = por %p119, %p120
      %p122 = scmp.ne.s32.totalorder %s113, %s114
      %p123 = scmp.eq.s32.totalorder %s30, 0
      %p124 = por %p122, %p123
      %p125 = scmp.ne.s32.totalorder %s113, %s114
      %p126 = scmp.eq.s32.totalorder %s31, 2
      %p127 = por %p125, %p126
      %p129 = scmp.ne.s32.totalorder %s114, %s128
      %p130 = scmp.eq.s32.totalorder %s31, 0
      %p131 = por %p129, %p130
      %s133 = sadd.s32 %s132, 1
      %p136 = scmp.eq.s32.totalorder %s25, 2
      %p137 = scmp.ne.s32.totalorder %s132, %s134
      %p138 = scmp.eq.s32.totalorder %s25, 0
      %p139 = por %p137, %p138
      %p140 = scmp.ne.s32.totalorder %s132, %s134
      %p141 = scmp.eq.s32.totalorder %s30, 2
      %p142 = por %p140, %p141
      %p143 = scmp.ne.s32.totalorder %s134, %s135
      %p144 = scmp.eq.s32.totalorder %s30, 0
      %p145 = por %p143, %p144
      %p146 = scmp.ne.s32.totalorder %s134, %s135
      %p147 = scmp.eq.s32.totalorder %s31, 2
      %p148 = por %p146, %p147
      %p150 = scmp.ne.s32.totalorder %s135, %s149
      %p151 = scmp.eq.s32.totalorder %s31, 0
      %p152 = por %p150, %p151
      %s154 = sadd.s32 %s153, 1
      %p157 = scmp.eq.s32.totalorder %s25, 2
      %p158 = scmp.ne.s32.totalorder %s153, %s155
      %p159 = scmp.eq.s32.totalorder %s25, 0
      %p160 = por %p158, %p159
      %p161 = scmp.ne.s32.totalorder %s153, %s155
      %p162 = scmp.eq.s32.totalorder %s30, 2
      %p163 = por %p161, %p162
      %p164 = scmp.ne.s32.totalorder %s155, %s156
      %p165 = scmp.eq.s32.totalorder %s30, 0
      %p166 = por %p164, %p165
      %p167 = scmp.ne.s32.totalorder %s155, %s156
      %p168 = scmp.eq.s32.totalorder %s31, 2
      %p169 = por %p167, %p168
      %p171 = scmp.ne.s32.totalorder %s156, %s170
      %p172 = scmp.eq.s32.totalorder %s31, 0
      %p173 = por %p171, %p172
      %s175 = sadd.s32 %s174, 1
      %p178 = scmp.eq.s32.totalorder %s25, 2
      %p179 = scmp.ne.s32.totalorder %s174, %s176
      %p180 = scmp.eq.s32.totalorder %s25, 0
      %p181 = por %p179, %p180
      %p182 = scmp.ne.s32.totalorder %s174, %s176
      %p183 = scmp.eq.s32.totalorder %s30, 2
      %p184 = por %p182, %p183
      %p185 = scmp.ne.s32.totalorder %s176, %s177
      %p186 = scmp.eq.s32.totalorder %s30, 0
      %p187 = por %p185, %p186
      %p188 = scmp.ne.s32.totalorder %s176, %s177
      %p189 = scmp.eq.s32.totalorder %s31, 2
      %p190 = por %p188, %p189
      %p192 = scmp.ne.s32.totalorder %s177, %s191
      %p193 = scmp.eq.s32.totalorder %s31, 0
      %p194 = por %p192, %p193
      %s196 = sadd.s32 %s195, 1
      %p199 = scmp.eq.s32.totalorder %s25, 2
      %p200 = scmp.ne.s32.totalorder %s195, %s197
      %p201 = scmp.eq.s32.totalorder %s25, 0
      %p202 = por %p200, %p201
      %p203 = scmp.ne.s32.totalorder %s195, %s197
      %p204 = scmp.eq.s32.totalorder %s30, 2
      %p205 = por %p203, %p204
      %p206 = scmp.ne.s32.totalorder %s197, %s198
      %p207 = scmp.eq.s32.totalorder %s30, 0
      %p208 = por %p206, %p207
      %p209 = scmp.ne.s32.totalorder %s197, %s198
      %p210 = scmp.eq.s32.totalorder %s31, 2
      %p211 = por %p209, %p210
      %p213 = scmp.ne.s32.totalorder %s198, %s212
      %p214 = scmp.eq.s32.totalorder %s31, 0
      %p215 = por %p213, %p214
      %s217 = sadd.s32 %s216, 1
      %p220 = scmp.eq.s32.totalorder %s25, 2
      %p221 = scmp.ne.s32.totalorder %s216, %s218
      %p222 = scmp.eq.s32.totalorder %s25, 0
      %p223 = por %p221, %p222
      %p224 = scmp.ne.s32.totalorder %s216, %s218
      %p225 = scmp.eq.s32.totalorder %s30, 2
      %p226 = por %p224, %p225
      %p227 = scmp.ne.s32.totalorder %s218, %s219
      %p228 = scmp.eq.s32.totalorder %s30, 0
      %p229 = por %p227, %p228
      %p230 = scmp.ne.s32.totalorder %s218, %s219
      %p231 = scmp.eq.s32.totalorder %s31, 2
      %p232 = por %p230, %p231
      %p234 = scmp.ne.s32.totalorder %s219, %s233
      %p235 = scmp.eq.s32.totalorder %s31, 0
      %p236 = por %p234, %p235
      %s238 = sadd.s32 %s237, 1
      %p241 = scmp.eq.s32.totalorder %s25, 2
      %p242 = scmp.ne.s32.totalorder %s237, %s239
      %p243 = scmp.eq.s32.totalorder %s25, 0
      %p244 = por %p242, %p243
      %p245 = scmp.ne.s32.totalorder %s237, %s239
      %p246 = scmp.eq.s32.totalorder %s30, 2
      %p247 = por %p245, %p246
      %p248 = scmp.ne.s32.totalorder %s239, %s240
      %p249 = scmp.eq.s32.totalorder %s30, 0
      %p250 = por %p248, %p249
      %p251 = scmp.ne.s32.totalorder %s239, %s240
      %p252 = scmp.eq.s32.totalorder %s31, 2
      %p253 = por %p251, %p252
      %p255 = scmp.ne.s32.totalorder %s240, %s254
      %p256 = scmp.eq.s32.totalorder %s31, 0
      %p257 = por %p255, %p256
      %s259 = sadd.s32 %s258, 1
      %p262 = scmp.eq.s32.totalorder %s25, 2
      %p263 = scmp.ne.s32.totalorder %s258, %s260
      %p264 = scmp.eq.s32.totalorder %s25, 0
      %p265 = por %p263, %p264
      %p266 = scmp.ne.s32.totalorder %s258, %s260
      %p267 = scmp.eq.s32.totalorder %s30, 2
      %p268 = por %p266, %p267
      %p269 = scmp.ne.s32.totalorder %s260, %s261
      %p270 = scmp.eq.s32.totalorder %s30, 0
      %p271 = por %p269, %p270
      %p272 = scmp.ne.s32.totalorder %s260, %s261
      %p273 = scmp.eq.s32.totalorder %s31, 2
      %p274 = por %p272, %p273
      %p276 = scmp.ne.s32.totalorder %s261, %s275
      %p277 = scmp.eq.s32.totalorder %s31, 0
      %p278 = por %p276, %p277
      %s280 = sadd.s32 %s279, 1
      %p283 = scmp.eq.s32.totalorder %s25, 2
      %p284 = scmp.ne.s32.totalorder %s279, %s281
      %p285 = scmp.eq.s32.totalorder %s25, 0
      %p286 = por %p284, %p285
      %p287 = scmp.ne.s32.totalorder %s279, %s281
      %p288 = scmp.eq.s32.totalorder %s30, 2
      %p289 = por %p287, %p288
      %p290 = scmp.ne.s32.totalorder %s281, %s282
      %p291 = scmp.eq.s32.totalorder %s30, 0
      %p292 = por %p290, %p291
      %p293 = scmp.ne.s32.totalorder %s281, %s282
      %p294 = scmp.eq.s32.totalorder %s31, 2
      %p295 = por %p293, %p294
      %p297 = scmp.ne.s32.totalorder %s282, %s296
      %p298 = scmp.eq.s32.totalorder %s31, 0
      %p299 = por %p297, %p298
      %s301 = sadd.s32 %s300, 1
      %p304 = scmp.eq.s32.totalorder %s25, 2
      %p305 = scmp.ne.s32.totalorder %s300, %s302
      %p306 = scmp.eq.s32.totalorder %s25, 0
      %p307 = por %p305, %p306
      %p308 = scmp.ne.s32.totalorder %s300, %s302
      %p309 = scmp.eq.s32.totalorder %s30, 2
      %p310 = por %p308, %p309
      %p311 = scmp.ne.s32.totalorder %s302, %s303
      %p312 = scmp.eq.s32.totalorder %s30, 0
      %p313 = por %p311, %p312
      %p314 = scmp.ne.s32.totalorder %s302, %s303
      %p315 = scmp.eq.s32.totalorder %s31, 2
      %p316 = por %p314, %p315
      %p318 = scmp.ne.s32.totalorder %s303, %s317
      %p319 = scmp.eq.s32.totalorder %s31, 0
      %p320 = por %p318, %p319
      %s322 = sadd.s32 %s321, 1
      %p325 = scmp.eq.s32.totalorder %s25, 2
      %p326 = scmp.ne.s32.totalorder %s321, %s323
      %p327 = scmp.eq.s32.totalorder %s25, 0
      %p328 = por %p326, %p327
      %p329 = scmp.ne.s32.totalorder %s321, %s323
      %p330 = scmp.eq.s32.totalorder %s30, 2
      %p331 = por %p329, %p330
      %p332 = scmp.ne.s32.totalorder %s323, %s324
      %p333 = scmp.eq.s32.totalorder %s30, 0
      %p334 = por %p332, %p333
      %p335 = scmp.ne.s32.totalorder %s323, %s324
      %p336 = scmp.eq.s32.totalorder %s31, 2
      %p337 = por %p335, %p336
      %p339 = scmp.ne.s32.totalorder %s324, %s338
      %p340 = scmp.eq.s32.totalorder %s31, 0
      %p341 = por %p339, %p340
      %s343 = sadd.s32 %s342, 1
      %p346 = scmp.eq.s32.totalorder %s25, 2
      %p347 = scmp.ne.s32.totalorder %s342, %s344
      %p348 = scmp.eq.s32.totalorder %s25, 0
      %p349 = por %p347, %p348
      %p350 = scmp.ne.s32.totalorder %s342, %s344
      %p351 = scmp.eq.s32.totalorder %s30, 2
      %p352 = por %p350, %p351
      %p353 = scmp.ne.s32.totalorder %s344, %s345
      %p354 = scmp.eq.s32.totalorder %s30, 0
      %p355 = por %p353, %p354
      %p356 = scmp.ne.s32.totalorder %s344, %s345
      %p357 = scmp.eq.s32.totalorder %s31, 2
      %p358 = por %p356, %p357
      %p360 = scmp.ne.s32.totalorder %s345, %s359
      %p361 = scmp.eq.s32.totalorder %s31, 0
      %p362 = por %p360, %p361
      %s364 = sadd.s32 %s363, 1
      %p367 = scmp.eq.s32.totalorder %s25, 2
      %p368 = scmp.ne.s32.totalorder %s363, %s365
      %p369 = scmp.eq.s32.totalorder %s25, 0
      %p370 = por %p368, %p369
      %p371 = scmp.ne.s32.totalorder %s363, %s365
      %p372 = scmp.eq.s32.totalorder %s30, 2
      %p373 = por %p371, %p372
      %p374 = scmp.ne.s32.totalorder %s365, %s366
      %p375 = scmp.eq.s32.totalorder %s30, 0
      %p376 = por %p374, %p375
      %p377 = scmp.ne.s32.totalorder %s365, %s366
      %p378 = scmp.eq.s32.totalorder %s31, 2
      %p379 = por %p377, %p378
      %p381 = scmp.ne.s32.totalorder %s366, %s380
      %p382 = scmp.eq.s32.totalorder %s31, 0
      %p383 = por %p381, %p382
      %s385 = sadd.s32 %s384, 1
      %p388 = scmp.eq.s32.totalorder %s25, 2
      %p389 = scmp.ne.s32.totalorder %s384, %s386
      %p390 = scmp.eq.s32.totalorder %s25, 0
      %p391 = por %p389, %p390
      %p392 = scmp.ne.s32.totalorder %s384, %s386
      %p393 = scmp.eq.s32.totalorder %s30, 2
      %p394 = por %p392, %p393
      %p395 = scmp.ne.s32.totalorder %s386, %s387
      %p396 = scmp.eq.s32.totalorder %s30, 0
      %p397 = por %p395, %p396
      %p398 = scmp.ne.s32.totalorder %s386, %s387
      %p399 = scmp.eq.s32.totalorder %s31, 2
      %p400 = por %p398, %p399
      %p402 = scmp.ne.s32.totalorder %s387, %s401
      %p403 = scmp.eq.s32.totalorder %s31, 0
      %p404 = por %p402, %p403
      %s406 = sadd.s32 %s405, 1
      %p409 = scmp.eq.s32.totalorder %s25, 2
      %p410 = scmp.ne.s32.totalorder %s405, %s407
      %p411 = scmp.eq.s32.totalorder %s25, 0
      %p412 = por %p410, %p411
      %p413 = scmp.ne.s32.totalorder %s405, %s407
      %p414 = scmp.eq.s32.totalorder %s30, 2
      %p415 = por %p413, %p414
      %p416 = scmp.ne.s32.totalorder %s407, %s408
      %p417 = scmp.eq.s32.totalorder %s30, 0
      %p418 = por %p416, %p417
      %p419 = scmp.ne.s32.totalorder %s407, %s408
      %p420 = scmp.eq.s32.totalorder %s31, 2
      %p421 = por %p419, %p420
      %p423 = scmp.ne.s32.totalorder %s408, %s422
      %p424 = scmp.eq.s32.totalorder %s31, 0
      %p425 = por %p423, %p424
      %s427 = sadd.s32 %s426, 1
      %p430 = scmp.eq.s32.totalorder %s25, 2
      %p431 = scmp.ne.s32.totalorder %s426, %s428
      %p432 = scmp.eq.s32.totalorder %s25, 0
      %p433 = por %p431, %p432
      %p434 = scmp.ne.s32.totalorder %s426, %s428
      %p435 = scmp.eq.s32.totalorder %s30, 2
      %p436 = por %p434, %p435
      %p437 = scmp.ne.s32.totalorder %s428, %s429
      %p438 = scmp.eq.s32.totalorder %s30, 0
      %p439 = por %p437, %p438
      %p440 = scmp.ne.s32.totalorder %s428, %s429
      %p441 = scmp.eq.s32.totalorder %s31, 2
      %p442 = por %p440, %p441
      %p444 = scmp.ne.s32.totalorder %s429, %s443
      %p445 = scmp.eq.s32.totalorder %s31, 0
      %p446 = por %p444, %p445
      %s447 = ssub.s32 %s25, %s32
      %p448 = scmp.eq.s32.totalorder %s447, 0
      %s450 = sadd.s32 %s449, 1
      %s451 = scalar_select %p448, %s449, %s450
      %p454 = pneg %p448
      %p455 = scmp.eq.s32.totalorder %s25, 2
      %p456 = por %p454, %p455
      %p457 = scmp.ne.s32.totalorder %s449, %s452
      %p458 = scmp.eq.s32.totalorder %s25, 0
      %p459 = por %p457, %p458
      %p460 = scmp.ne.s32.totalorder %s449, %s452
      %p461 = scmp.eq.s32.totalorder %s30, 2
      %p462 = por %p460, %p461
      %p463 = scmp.ne.s32.totalorder %s452, %s453
      %p464 = scmp.eq.s32.totalorder %s30, 0
      %p465 = por %p463, %p464
      %p466 = scmp.ne.s32.totalorder %s452, %s453
      %p467 = scmp.eq.s32.totalorder %s31, 2
      %p468 = por %p466, %p467
      %p470 = scmp.ne.s32.totalorder %s453, %s469
      %p471 = scmp.eq.s32.totalorder %s31, 0
      %p472 = por %p470, %p471
      %p473 = scmp.le.s32.totalorder 1, %s25
      %p474 = scmp.lt.s32.totalorder %s25, 4
      %p475 = pnand %p473, %p474
      %p476 = pneg %p475
      // Predicated region
      $region9: #{tpu_custom_call.1} parent=5 // pred_check
        _
      $region10: #{tpu_custom_call.1} parent=5 // pred_check_branch
        %478 = sbr.rel (%p475) target = $region12
      $region11: #{tpu_custom_call.1} parent=5 // pred_region
        %s479 = ssub.s32 %s25, 1
        // Predicated region
        $region13: #{tpu_custom_call.1} parent=11 // pred_check
          %p480 = pneg %p124
        $region14: #{tpu_custom_call.1} parent=11 // pred_check_branch
          %482 = sbr.rel (%p480) target = $region16
        $region15: #{tpu_custom_call.1} parent=11 // pred_region
          _
        $region16: #{tpu_custom_call.1} parent=11 // pred_fallthru
          _
        // Predicated region
        $region17: #{tpu_custom_call.1} parent=11 // pred_check
          %p483 = pneg %p145
        $region18: #{tpu_custom_call.1} parent=11 // pred_check_branch
          %485 = sbr.rel (%p483) target = $region20
        $region19: #{tpu_custom_call.1} parent=11 // pred_region
          _
        $region20: #{tpu_custom_call.1} parent=11 // pred_fallthru
          _
        // Predicated region
        $region21: #{tpu_custom_call.1} parent=11 // pred_check
          %p486 = pneg %p166
        $region22: #{tpu_custom_call.1} parent=11 // pred_check_branch
          %488 = sbr.rel (%p486) target = $region24
        $region23: #{tpu_custom_call.1} parent=11 // pred_region
          _
        $region24: #{tpu_custom_call.1} parent=11 // pred_fallthru
          _
        // Predicated region
        $region25: #{tpu_custom_call.1} parent=11 // pred_check
          %p489 = pneg %p187
        $region26: #{tpu_custom_call.1} parent=11 // pred_check_branch
          %491 = sbr.rel (%p489) target = $region28
        $region27: #{tpu_custom_call.1} parent=11 // pred_region
          _
        $region28: #{tpu_custom_call.1} parent=11 // pred_fallthru
          _
        // Predicated region
        $region29: #{tpu_custom_call.1} parent=11 // pred_check
          %p492 = pneg %p208
        $region30: #{tpu_custom_call.1} parent=11 // pred_check_branch
          %494 = sbr.rel (%p492) target = $region32
        $region31: #{tpu_custom_call.1} parent=11 // pred_region
          _
        $region32: #{tpu_custom_call.1} parent=11 // pred_fallthru
          _
        // Predicated region
        $region33: #{tpu_custom_call.1} parent=11 // pred_check
          %p495 = pneg %p229
        $region34: #{tpu_custom_call.1} parent=11 // pred_check_branch
          %497 = sbr.rel (%p495) target = $region36
        $region35: #{tpu_custom_call.1} parent=11 // pred_region
          _
        $region36: #{tpu_custom_call.1} parent=11 // pred_fallthru
          _
        // Predicated region
        $region37: #{tpu_custom_call.1} parent=11 // pred_check
          %p498 = pneg %p250
        $region38: #{tpu_custom_call.1} parent=11 // pred_check_branch
          %500 = sbr.rel (%p498) target = $region40
        $region39: #{tpu_custom_call.1} parent=11 // pred_region
          _
        $region40: #{tpu_custom_call.1} parent=11 // pred_fallthru
          _
        // Predicated region
        $region41: #{tpu_custom_call.1} parent=11 // pred_check
          %p501 = pneg %p271
        $region42: #{tpu_custom_call.1} parent=11 // pred_check_branch
          %503 = sbr.rel (%p501) target = $region44
        $region43: #{tpu_custom_call.1} parent=11 // pred_region
          _
        $region44: #{tpu_custom_call.1} parent=11 // pred_fallthru
          _
        // Predicated region
        $region45: #{tpu_custom_call.1} parent=11 // pred_check
          %p504 = pneg %p292
        $region46: #{tpu_custom_call.1} parent=11 // pred_check_branch
          %506 = sbr.rel (%p504) target = $region48
        $region47: #{tpu_custom_call.1} parent=11 // pred_region
          _
        $region48: #{tpu_custom_call.1} parent=11 // pred_fallthru
          _
        // Predicated region
        $region49: #{tpu_custom_call.1} parent=11 // pred_check
          %p507 = pneg %p313
        $region50: #{tpu_custom_call.1} parent=11 // pred_check_branch
          %509 = sbr.rel (%p507) target = $region52
        $region51: #{tpu_custom_call.1} parent=11 // pred_region
          _
        $region52: #{tpu_custom_call.1} parent=11 // pred_fallthru
          _
        // Predicated region
        $region53: #{tpu_custom_call.1} parent=11 // pred_check
          %p510 = pneg %p334
        $region54: #{tpu_custom_call.1} parent=11 // pred_check_branch
          %512 = sbr.rel (%p510) target = $region56
        $region55: #{tpu_custom_call.1} parent=11 // pred_region
          _
        $region56: #{tpu_custom_call.1} parent=11 // pred_fallthru
          _
        // Predicated region
        $region57: #{tpu_custom_call.1} parent=11 // pred_check
          %p513 = pneg %p355
        $region58: #{tpu_custom_call.1} parent=11 // pred_check_branch
          %515 = sbr.rel (%p513) target = $region60
        $region59: #{tpu_custom_call.1} parent=11 // pred_region
          _
        $region60: #{tpu_custom_call.1} parent=11 // pred_fallthru
          _
        // Predicated region
        $region61: #{tpu_custom_call.1} parent=11 // pred_check
          %p516 = pneg %p376
        $region62: #{tpu_custom_call.1} parent=11 // pred_check_branch
          %518 = sbr.rel (%p516) target = $region64
        $region63: #{tpu_custom_call.1} parent=11 // pred_region
          _
        $region64: #{tpu_custom_call.1} parent=11 // pred_fallthru
          _
        // Predicated region
        $region65: #{tpu_custom_call.1} parent=11 // pred_check
          %p519 = pneg %p397
        $region66: #{tpu_custom_call.1} parent=11 // pred_check_branch
          %521 = sbr.rel (%p519) target = $region68
        $region67: #{tpu_custom_call.1} parent=11 // pred_region
          _
        $region68: #{tpu_custom_call.1} parent=11 // pred_fallthru
          _
        // Predicated region
        $region69: #{tpu_custom_call.1} parent=11 // pred_check
          %p522 = pneg %p418
        $region70: #{tpu_custom_call.1} parent=11 // pred_check_branch
          %524 = sbr.rel (%p522) target = $region72
        $region71: #{tpu_custom_call.1} parent=11 // pred_region
          _
        $region72: #{tpu_custom_call.1} parent=11 // pred_fallthru
          _
        // Predicated region
        $region73: #{tpu_custom_call.1} parent=11 // pred_check
          %p525 = pneg %p439
        $region74: #{tpu_custom_call.1} parent=11 // pred_check_branch
          %527 = sbr.rel (%p525) target = $region76
        $region75: #{tpu_custom_call.1} parent=11 // pred_region
          _
        $region76: #{tpu_custom_call.1} parent=11 // pred_fallthru
          _
      $region12: #{tpu_custom_call.1} parent=5 // pred_fallthru
        _
      %p528 = scmp.lt.s32.totalorder %s25, 3
      // Predicated region
      $region77: #{tpu_custom_call.1} parent=5 // pred_check
        %p529 = pneg %p528
      $region78: #{tpu_custom_call.1} parent=5 // pred_check_branch
        %531 = sbr.rel (%p529) target = $region80
      $region79: #{tpu_custom_call.1} parent=5 // pred_region
        // Predicated region
        $region81: #{tpu_custom_call.1} parent=79 // pred_check
          %p532 = pneg %p45
        $region82: #{tpu_custom_call.1} parent=79 // pred_check_branch
          %534 = sbr.rel (%p532) target = $region84
        $region83: #{tpu_custom_call.1} parent=79 // pred_region
          %s535 = smul.u32 2, %s25
          %p536 = scmp.lt.s32.totalorder %s535, 5
          %s537 = scalar_select %p536, %s535, 5
          %s538 = smul.addr %s537, 8
          %s539 = scalar_lea.vmem %s0, %s538
          %s540 = smul.u32 2, %s25
        $region84: #{tpu_custom_call.1} parent=79 // pred_fallthru
          _
        // Predicated region
        $region85: #{tpu_custom_call.1} parent=79 // pred_check
          %p541 = pneg %p71
        $region86: #{tpu_custom_call.1} parent=79 // pred_check_branch
          %543 = sbr.rel (%p541) target = $region88
        $region87: #{tpu_custom_call.1} parent=79 // pred_region
          %s544 = sand.u32 %s61, 1
          %s545 = sand.u32 %s61, 1
          %s546 = smul.addr %s545, 48
          %s547 = scalar_lea.vmem [#allocation2], %s546
          %s548 = smul.u32 2, %s25
          %s549 = smul.addr %s548, 8
          %s550 = scalar_lea.vmem %s1, %s549
          // Predicated region
          $region89: #{tpu_custom_call.1} parent=87 // pred_check
            _
          $region90: #{tpu_custom_call.1} parent=87 // pred_check_branch
            %552 = sbr.rel (0) target = $region92
          $region91: #{tpu_custom_call.1} parent=87 // pred_region
            // Predicated region
            $region93: #{tpu_custom_call.1} parent=91 // pred_check
              _
            $region94: #{tpu_custom_call.1} parent=91 // pred_check_branch
              %554 = sbr.rel (0) target = $region96
            $region95: #{tpu_custom_call.1} parent=91 // pred_region
              // Predicated region
              $region108: #{tpu_custom_call.1} parent=95 // pred_check
                _
              $region109: #{tpu_custom_call.1} parent=95 // pred_check_branch
                %580 = sbr.rel (0) target = $region111
              $region110: #{tpu_custom_call.1} parent=95 // pred_region
                loop: start=0, step=1, limit=1
                $region112: #{tpu_custom_call.1} parent=110 // loop_pre_header
                  _
                $region113: #{tpu_custom_call.1} parent=110 // loop_header
                  %s582 = sphi 0, %s586
                  %p583 = scmp.ge.s32.totalorder %s582, 1
                  %s587 = sphi %s550, %s550
                  %s588 = sphi %s547, %s547
                $region114: #{tpu_custom_call.1} parent=110 // loop_header_branch
                  %585 = sbr.rel (%p583) target = $region118
                $region115: #{tpu_custom_call.1} parent=110 // loop_body
                  %v589 = vld [vmem:[%s587] sm:$0xff]
                  %590 = vst [vmem:[%s588] sm:$0xff] %v589
                  %v591 = vld [vmem:[%s587 + $0x8] sm:$0xff]
                  %592 = vst [vmem:[%s588 + $0x8] sm:$0xff] %v591
                  %v593 = vld [vmem:[%s587 + $0x30] sm:$0xff]
                  %594 = vst [vmem:[%s588 + $0x10] sm:$0xff] %v593
                  %v595 = vld [vmem:[%s587 + $0x38] sm:$0xff]
                  %596 = vst [vmem:[%s588 + $0x18] sm:$0xff] %v595
                  %v597 = vld [vmem:[%s587 + $0x60] sm:$0xff]
                  %598 = vst [vmem:[%s588 + $0x20] sm:$0xff] %v597
                  %v599 = vld [vmem:[%s587 + $0x68] sm:$0xff]
                  %600 = vst [vmem:[%s588 + $0x28] sm:$0xff] %v599
                $region116: #{tpu_custom_call.1} parent=110 // loop_footer
                  %s586 = sadd.s32 1, %s582
                $region117: #{tpu_custom_call.1} parent=110 // loop_footer_branch
                  %581 = sbr.rel target = $region113
                $region118: #{tpu_custom_call.1} parent=110 // loop_exit
                  _
              $region111: #{tpu_custom_call.1} parent=95 // pred_fallthru
                _
              // Predicated region
              $region119: #{tpu_custom_call.1} parent=95 // pred_check
                _
              $region120: #{tpu_custom_call.1} parent=95 // pred_check_branch
                %602 = sbr.rel target = $region122
              $region121: #{tpu_custom_call.1} parent=95 // pred_region
                _
              $region122: #{tpu_custom_call.1} parent=95 // pred_fallthru
                _
            $region96: #{tpu_custom_call.1} parent=91 // pred_fallthru
              _
            // Predicated region
            $region97: #{tpu_custom_call.1} parent=91 // pred_check
              _
            $region98: #{tpu_custom_call.1} parent=91 // pred_check_branch
              %556 = sbr.rel target = $region100
            $region99: #{tpu_custom_call.1} parent=91 // pred_region
              %s558 = ssub.s32 256, 1
              loop: start=0, step=1, limit=1
              $region101: #{tpu_custom_call.1} parent=99 // loop_pre_header
                _
              $region102: #{tpu_custom_call.1} parent=99 // loop_header
                %s560 = sphi 0, %s564
                %p561 = scmp.ge.s32.totalorder %s560, 1
                %s565 = sphi %s550, %s550
                %s566 = sphi %s547, %s547
              $region103: #{tpu_custom_call.1} parent=99 // loop_header_branch
                %563 = sbr.rel (%p561) target = $region107
              $region104: #{tpu_custom_call.1} parent=99 // loop_body
                %v567 = vld [vmem:[%s565] sm:%s558]
                %568 = vst [vmem:[%s566] sm:%s558] %v567
                %v569 = vld [vmem:[%s565 + $0x8] sm:%s558]
                %570 = vst [vmem:[%s566 + $0x8] sm:%s558] %v569
                %v571 = vld [vmem:[%s565 + $0x30] sm:%s558]
                %572 = vst [vmem:[%s566 + $0x10] sm:%s558] %v571
                %v573 = vld [vmem:[%s565 + $0x38] sm:%s558]
                %574 = vst [vmem:[%s566 + $0x18] sm:%s558] %v573
                %v575 = vld [vmem:[%s565 + $0x60] sm:%s558]
                %576 = vst [vmem:[%s566 + $0x20] sm:%s558] %v575
                %v577 = vld [vmem:[%s565 + $0x68] sm:%s558]
                %578 = vst [vmem:[%s566 + $0x28] sm:%s558] %v577
              $region105: #{tpu_custom_call.1} parent=99 // loop_footer
                %s564 = sadd.s32 1, %s560
              $region106: #{tpu_custom_call.1} parent=99 // loop_footer_branch
                %559 = sbr.rel target = $region102
              $region107: #{tpu_custom_call.1} parent=99 // loop_exit
                _
            $region100: #{tpu_custom_call.1} parent=91 // pred_fallthru
              _
          $region92: #{tpu_custom_call.1} parent=87 // pred_fallthru
            _
          %603 = vnop
        $region88: #{tpu_custom_call.1} parent=79 // pred_fallthru
          _
        // Predicated region
        $region123: #{tpu_custom_call.1} parent=79 // pred_check
          %p604 = pneg %p97
        $region124: #{tpu_custom_call.1} parent=79 // pred_check_branch
          %606 = sbr.rel (%p604) target = $region126
        $region125: #{tpu_custom_call.1} parent=79 // pred_region
          %s607 = sand.u32 %s87, 1
          %s608 = sand.u32 %s87, 1
          %s609 = smul.addr %s608, 48
          %s610 = scalar_lea.vmem [#allocation3], %s609
          %s611 = smul.u32 2, %s25
          %s612 = smul.addr %s611, 8
          %s613 = scalar_lea.vmem %s2, %s612
          // Predicated region
          $region127: #{tpu_custom_call.1} parent=125 // pred_check
            _
          $region128: #{tpu_custom_call.1} parent=125 // pred_check_branch
            %615 = sbr.rel (0) target = $region130
          $region129: #{tpu_custom_call.1} parent=125 // pred_region
            // Predicated region
            $region131: #{tpu_custom_call.1} parent=129 // pred_check
              _
            $region132: #{tpu_custom_call.1} parent=129 // pred_check_branch
              %617 = sbr.rel (0) target = $region134
            $region133: #{tpu_custom_call.1} parent=129 // pred_region
              // Predicated region
              $region146: #{tpu_custom_call.1} parent=133 // pred_check
                _
              $region147: #{tpu_custom_call.1} parent=133 // pred_check_branch
                %643 = sbr.rel (0) target = $region149
              $region148: #{tpu_custom_call.1} parent=133 // pred_region
                loop: start=0, step=1, limit=1
                $region150: #{tpu_custom_call.1} parent=148 // loop_pre_header
                  _
                $region151: #{tpu_custom_call.1} parent=148 // loop_header
                  %s645 = sphi 0, %s649
                  %p646 = scmp.ge.s32.totalorder %s645, 1
                  %s650 = sphi %s613, %s613
                  %s651 = sphi %s610, %s610
                $region152: #{tpu_custom_call.1} parent=148 // loop_header_branch
                  %648 = sbr.rel (%p646) target = $region156
                $region153: #{tpu_custom_call.1} parent=148 // loop_body
                  %v652 = vld [vmem:[%s650] sm:$0xff]
                  %653 = vst [vmem:[%s651] sm:$0xff] %v652
                  %v654 = vld [vmem:[%s650 + $0x8] sm:$0xff]
                  %655 = vst [vmem:[%s651 + $0x8] sm:$0xff] %v654
                  %v656 = vld [vmem:[%s650 + $0x30] sm:$0xff]
                  %657 = vst [vmem:[%s651 + $0x10] sm:$0xff] %v656
                  %v658 = vld [vmem:[%s650 + $0x38] sm:$0xff]
                  %659 = vst [vmem:[%s651 + $0x18] sm:$0xff] %v658
                  %v660 = vld [vmem:[%s650 + $0x60] sm:$0xff]
                  %661 = vst [vmem:[%s651 + $0x20] sm:$0xff] %v660
                  %v662 = vld [vmem:[%s650 + $0x68] sm:$0xff]
                  %663 = vst [vmem:[%s651 + $0x28] sm:$0xff] %v662
                $region154: #{tpu_custom_call.1} parent=148 // loop_footer
                  %s649 = sadd.s32 1, %s645
                $region155: #{tpu_custom_call.1} parent=148 // loop_footer_branch
                  %644 = sbr.rel target = $region151
                $region156: #{tpu_custom_call.1} parent=148 // loop_exit
                  _
              $region149: #{tpu_custom_call.1} parent=133 // pred_fallthru
                _
              // Predicated region
              $region157: #{tpu_custom_call.1} parent=133 // pred_check
                _
              $region158: #{tpu_custom_call.1} parent=133 // pred_check_branch
                %665 = sbr.rel target = $region160
              $region159: #{tpu_custom_call.1} parent=133 // pred_region
                _
              $region160: #{tpu_custom_call.1} parent=133 // pred_fallthru
                _
            $region134: #{tpu_custom_call.1} parent=129 // pred_fallthru
              _
            // Predicated region
            $region135: #{tpu_custom_call.1} parent=129 // pred_check
              _
            $region136: #{tpu_custom_call.1} parent=129 // pred_check_branch
              %619 = sbr.rel target = $region138
            $region137: #{tpu_custom_call.1} parent=129 // pred_region
              %s621 = ssub.s32 256, 1
              loop: start=0, step=1, limit=1
              $region139: #{tpu_custom_call.1} parent=137 // loop_pre_header
                _
              $region140: #{tpu_custom_call.1} parent=137 // loop_header
                %s623 = sphi 0, %s627
                %p624 = scmp.ge.s32.totalorder %s623, 1
                %s628 = sphi %s613, %s613
                %s629 = sphi %s610, %s610
              $region141: #{tpu_custom_call.1} parent=137 // loop_header_branch
                %626 = sbr.rel (%p624) target = $region145
              $region142: #{tpu_custom_call.1} parent=137 // loop_body
                %v630 = vld [vmem:[%s628] sm:%s621]
                %631 = vst [vmem:[%s629] sm:%s621] %v630
                %v632 = vld [vmem:[%s628 + $0x8] sm:%s621]
                %633 = vst [vmem:[%s629 + $0x8] sm:%s621] %v632
                %v634 = vld [vmem:[%s628 + $0x30] sm:%s621]
                %635 = vst [vmem:[%s629 + $0x10] sm:%s621] %v634
                %v636 = vld [vmem:[%s628 + $0x38] sm:%s621]
                %637 = vst [vmem:[%s629 + $0x18] sm:%s621] %v636
                %v638 = vld [vmem:[%s628 + $0x60] sm:%s621]
                %639 = vst [vmem:[%s629 + $0x20] sm:%s621] %v638
                %v640 = vld [vmem:[%s628 + $0x68] sm:%s621]
                %641 = vst [vmem:[%s629 + $0x28] sm:%s621] %v640
              $region143: #{tpu_custom_call.1} parent=137 // loop_footer
                %s627 = sadd.s32 1, %s623
              $region144: #{tpu_custom_call.1} parent=137 // loop_footer_branch
                %622 = sbr.rel target = $region140
              $region145: #{tpu_custom_call.1} parent=137 // loop_exit
                _
            $region138: #{tpu_custom_call.1} parent=129 // pred_fallthru
              _
          $region130: #{tpu_custom_call.1} parent=125 // pred_fallthru
            _
          %666 = vnop
        $region126: #{tpu_custom_call.1} parent=79 // pred_fallthru
          _
      $region80: #{tpu_custom_call.1} parent=5 // pred_fallthru
        _
      %p667 = scmp.le.s32.totalorder 1, %s25
      %p668 = scmp.lt.s32.totalorder %s25, 4
      %p669 = pnand %p667, %p668
      %p670 = pneg %p669
      // Predicated region
      $region161: #{tpu_custom_call.1} parent=5 // pred_check
        _
      $region162: #{tpu_custom_call.1} parent=5 // pred_check_branch
        %672 = sbr.rel (%p669) target = $region164
      $region163: #{tpu_custom_call.1} parent=5 // pred_region
        %s673 = ssub.s32 %s25, 1
        %s674 = sand.u32 %s64, 1
        %s675 = sand.u32 %s64, 1
        %s676 = smul.addr %s675, 48
        %s677 = scalar_lea.vmem [#allocation2], %s676
        // Predicated region
        $region165: #{tpu_custom_call.1} parent=163 // pred_check
          %p678 = pneg %p77
        $region166: #{tpu_custom_call.1} parent=163 // pred_check_branch
          %680 = sbr.rel (%p678) target = $region168
        $region167: #{tpu_custom_call.1} parent=163 // pred_region
          _
        $region168: #{tpu_custom_call.1} parent=163 // pred_fallthru
          _
        %s681 = sand.u32 %s90, 1
        %s682 = sand.u32 %s90, 1
        %s683 = smul.addr %s682, 48
        %s684 = scalar_lea.vmem [#allocation3], %s683
        // Predicated region
        $region169: #{tpu_custom_call.1} parent=163 // pred_check
          %p685 = pneg %p103
        $region170: #{tpu_custom_call.1} parent=163 // pred_check_branch
          %687 = sbr.rel (%p685) target = $region172
        $region171: #{tpu_custom_call.1} parent=163 // pred_region
          _
        $region172: #{tpu_custom_call.1} parent=163 // pred_fallthru
          _
        %s688 = smul.u32 2, %s30
        %p689 = scmp.lt.s32.totalorder %s688, 5
        %s690 = scalar_select %p689, %s688, 5
        %s691 = smul.addr %s690, 8
        %s692 = scalar_lea.vmem %s0, %s691
        %p693 = pneg %p51
        %p694 = pneg %p48
        %s695 = sand.u32 %s64, 1
        %s696 = sand.u32 %s64, 1
        %s697 = smul.addr %s696, 48
        %s698 = scalar_lea.vmem [#allocation2], %s697
        %p699 = pneg %p77
        %p700 = pneg %p74
        %s701 = sand.u32 %s90, 1
        %s702 = sand.u32 %s90, 1
        %s703 = smul.addr %s702, 48
        %s704 = scalar_lea.vmem [#allocation3], %s703
        %p705 = pneg %p103
        %p706 = pneg %p100
        %p707 = pneg %p124
        %p708 = pneg %p121
        %p709 = pneg %p145
        %p710 = pneg %p142
        %p711 = pneg %p166
        %p712 = pneg %p163
        %p713 = pneg %p187
        %p714 = pneg %p184
        %p715 = pneg %p208
        %p716 = pneg %p205
        %p717 = pneg %p229
        %p718 = pneg %p226
        %p719 = pneg %p250
        %p720 = pneg %p247
        %p721 = pneg %p271
        %p722 = pneg %p268
        %p723 = pneg %p292
        %p724 = pneg %p289
        %p725 = pneg %p313
        %p726 = pneg %p310
        %p727 = pneg %p334
        %p728 = pneg %p331
        %p729 = pneg %p355
        %p730 = pneg %p352
        %p731 = pneg %p376
        %p732 = pneg %p373
        %p733 = pneg %p397
        %p734 = pneg %p394
        %p735 = pneg %p418
        %p736 = pneg %p415
        %p737 = pneg %p439
        %p738 = pneg %p436
        %p739 = pneg %p465
        %p740 = pneg %p462
        %s741 = smul.u32 2, %s30
        %p742 = scmp.lt.s32.totalorder %s741, 5
        %s743 = scalar_select %p742, %s741, 5
        %s744 = smul.addr %s743, 8
        %s745 = scalar_lea.vmem %s19, %s744
        %s746 = smul.u32 2, %s30
        %p747 = scmp.lt.s32.totalorder %s746, 5
        %s748 = scalar_select %p747, %s746, 5
        %s749 = smul.addr %s748, 8
        %s750 = scalar_lea.vmem %s0, %s749
        %s751 = smul.u32 2, %s30
        %s752 = smul.u32 2, %s30
        %s753 = smul.u32 2, %s30
        %s754 = smul.u32 2, %s30
        %p755 = scmp.lt.s32.totalorder %s754, 5
        %s756 = scalar_select %p755, %s754, 5
        %s757 = smul.addr %s756, 8
        %s758 = scalar_lea.vmem %s19, %s757
        %s759 = smul.u32 2, %s30
        %v760 = vld [vmem:[%s750] sm:$0xff]
        %v761 = vld [vmem:[%s750 + $0x8] sm:$0xff]
        %v762 = vld [vmem:[%s5] sm:$0xff]
        %v763 = vld [vmem:[%s5 + $0x8] sm:$0xff]
        %v764 = vld [vmem:[%s5 + $0x10] sm:$0xff]
        %v765 = vld [vmem:[%s5 + $0x18] sm:$0x7]
        %v766 = vld [vmem:[%s6] sm:$0x1]
        %v768 = vlaneseq
        %v769 = vshrl.u32 %v768, 7
        %v770 = vsub.s32 0, %v769
        %v771 = vrot.slane %v766, %v770
        %vm773 = vcmask 220160
        %v775 = vsel %vm773, %v760, 0
        %v778 = vsel %vm773, %v761, 0
        %vm780 = vcmask 1042432
        %v782 = vsel %vm780, %v765, 0
        %784 = vmatprep.subr.mxu0 0.0
        %785 = vmatpush1.msra.mxu0 0.0
        %786 = vmatprep.subr.mxu0 0.0
        %787 = vmatpush1.msra.mxu0 0.0
        %788 = vmatprep.subr.mxu0 0.0
        %789 = vmatpush1.msra.mxu0 0.0
        %790 = vmatprep.subr.mxu0 0.0
        %791 = vmatpush1.msra.mxu0 0.0
        %792 = vmatprep.subr.mxu0 0.0
        %793 = vmatpush1.msra.mxu0 0.0
        %794 = vmatprep.subr.mxu0 0.0
        %795 = vmatpush1.msra.mxu0 0.0
        %796 = vmatprep.subr.mxu0 0.0
        %797 = vmatpush1.msra.mxu0 0.0
        %798 = vmatprep.subr.mxu0 0.0
        %799 = vmatpush1.msra.mxu0 0.0
        %800 = vmatprep.subr.mxu0 0.0
        %801 = vmatpush1.msra.mxu0 0.0
        %802 = vmatprep.subr.mxu0 0.0
        %803 = vmatpush1.msra.mxu0 0.0
        %804 = vmatprep.subr.mxu0 0.0
        %805 = vmatpush1.msra.mxu0 0.0
        %806 = vmatprep.subr.mxu0 0.0
        %807 = vmatpush1.msra.mxu0 0.0
        %808 = vmatprep.subr.mxu0 0.0
        %809 = vmatpush1.msra.mxu0 %v782
        %810 = vmatprep.subr.mxu0 0.0
        %811 = vmatpush1.msra.mxu0 %v764
        %812 = vmatprep.subr.mxu0 0.0
        %813 = vmatpush1.msra.mxu0 %v763
        %814 = vmatprep.subr.mxu0 0.0
        %815 = vmatpush1.msra.mxu0 %v762
        %816 = vmatprep.subr.mxu0 0.0
        %817 = vmatpush2.msra.mxu0 0.0
        %818 = vmatprep.subr.mxu0 0.0
        %819 = vmatpush2.msra.mxu0 0.0
        %820 = vmatprep.subr.mxu0 0.0
        %821 = vmatpush2.msra.mxu0 0.0
        %822 = vmatprep.subr.mxu0 0.0
        %823 = vmatpush2.msra.mxu0 0.0
        %824 = vmatprep.subr.mxu0 0.0
        %825 = vmatpush2.msra.mxu0 0.0
        %826 = vmatprep.subr.mxu0 0.0
        %827 = vmatpush2.msra.mxu0 0.0
        %828 = vmatprep.subr.mxu0 0.0
        %829 = vmatpush2.msra.mxu0 0.0
        %830 = vmatprep.subr.mxu0 0.0
        %831 = vmatpush2.msra.mxu0 0.0
        %832 = vmatprep.subr.mxu0 0.0
        %833 = vmatpush2.msra.mxu0 0.0
        %834 = vmatprep.subr.mxu0 0.0
        %835 = vmatpush2.msra.mxu0 0.0
        %836 = vmatprep.subr.mxu0 0.0
        %837 = vmatpush2.msra.mxu0 0.0
        %838 = vmatprep.subr.mxu0 0.0
        %839 = vmatpush2.msra.mxu0 0.0
        %840 = vmatprep.subr.mxu0 0.0
        %841 = vmatpush2.msra.mxu0 0.0
        %842 = vmatprep.subr.mxu0 0.0
        %843 = vmatpush2.msra.mxu0 0.0
        %844 = vmatprep.subr.mxu0 0.0
        %845 = vmatpush2.msra.mxu0 0.0
        %846 = vmatprep.subr.mxu0 0.0
        %847 = vmatpush2.msra.mxu0 0.0
        %848 = vmatprep.mubr.f32.mxu0 0.0
        %849 = vmatmul.mubr.f32.gmra.mxu0 %v775
        %v850 = vpop.f32.mrf.mxu0
        %v851 = vadd.f32 %v771, %v850
        %v852 = vpop.f32.mrf.mxu0
        %853 = vmatprep.mubr.f32.mxu0 0.0
        %854 = vmatmul.mubr.f32.gmra.mxu0 %v778
        %v855 = vpop.f32.mrf.mxu0
        %v856 = vadd.f32 %v771, %v855
        %v857 = vpop.f32.mrf.mxu0
        %858 = vdwg.mxu0
        %v859 = vmax.f32 %v851, 0.0
        %v860 = vmax.f32 %v856, 0.0
        %v861 = vld [vmem:[%s9] sm:$0xff]
        %v862 = vld [vmem:[%s9 + $0x8] sm:$0xff]
        %v863 = vld [vmem:[%s10] sm:$0x1]
        %v865 = vlaneseq
        %v866 = vshrl.u32 %v865, 7
        %v867 = vsub.s32 0, %v866
        %v868 = vrot.slane %v863, %v867
        %vm870 = vcmask 130048
        %v872 = vsel %vm870, %v859, 0
        %v875 = vsel %vm870, %v860, 0
        %877 = vmatprep.subr.mxu0 0.0
        %878 = vmatpush1.msra.mxu0 0.0
        %879 = vmatprep.subr.mxu0 0.0
        %880 = vmatpush1.msra.mxu0 0.0
        %881 = vmatprep.subr.mxu0 0.0
        %882 = vmatpush1.msra.mxu0 0.0
        %883 = vmatprep.subr.mxu0 0.0
        %884 = vmatpush1.msra.mxu0 0.0
        %885 = vmatprep.subr.mxu0 0.0
        %886 = vmatpush1.msra.mxu0 0.0
        %887 = vmatprep.subr.mxu0 0.0
        %888 = vmatpush1.msra.mxu0 0.0
        %889 = vmatprep.subr.mxu0 0.0
        %890 = vmatpush1.msra.mxu0 0.0
        %891 = vmatprep.subr.mxu0 0.0
        %892 = vmatpush1.msra.mxu0 0.0
        %893 = vmatprep.subr.mxu0 0.0
        %894 = vmatpush1.msra.mxu0 0.0
        %895 = vmatprep.subr.mxu0 0.0
        %896 = vmatpush1.msra.mxu0 0.0
        %897 = vmatprep.subr.mxu0 0.0
        %898 = vmatpush1.msra.mxu0 0.0
        %899 = vmatprep.subr.mxu0 0.0
        %900 = vmatpush1.msra.mxu0 0.0
        %901 = vmatprep.subr.mxu0 0.0
        %902 = vmatpush1.msra.mxu0 0.0
        %903 = vmatprep.subr.mxu0 0.0
        %904 = vmatpush1.msra.mxu0 0.0
        %905 = vmatprep.subr.mxu0 0.0
        %906 = vmatpush1.msra.mxu0 %v862
        %907 = vmatprep.subr.mxu0 0.0
        %908 = vmatpush1.msra.mxu0 %v861
        %909 = vmatprep.subr.mxu0 0.0
        %910 = vmatpush2.msra.mxu0 0.0
        %911 = vmatprep.subr.mxu0 0.0
        %912 = vmatpush2.msra.mxu0 0.0
        %913 = vmatprep.subr.mxu0 0.0
        %914 = vmatpush2.msra.mxu0 0.0
        %915 = vmatprep.subr.mxu0 0.0
        %916 = vmatpush2.msra.mxu0 0.0
        %917 = vmatprep.subr.mxu0 0.0
        %918 = vmatpush2.msra.mxu0 0.0
        %919 = vmatprep.subr.mxu0 0.0
        %920 = vmatpush2.msra.mxu0 0.0
        %921 = vmatprep.subr.mxu0 0.0
        %922 = vmatpush2.msra.mxu0 0.0
        %923 = vmatprep.subr.mxu0 0.0
        %924 = vmatpush2.msra.mxu0 0.0
        %925 = vmatprep.subr.mxu0 0.0
        %926 = vmatpush2.msra.mxu0 0.0
        %927 = vmatprep.subr.mxu0 0.0
        %928 = vmatpush2.msra.mxu0 0.0
        %929 = vmatprep.subr.mxu0 0.0
        %930 = vmatpush2.msra.mxu0 0.0
        %931 = vmatprep.subr.mxu0 0.0
        %932 = vmatpush2.msra.mxu0 0.0
        %933 = vmatprep.subr.mxu0 0.0
        %934 = vmatpush2.msra.mxu0 0.0
        %935 = vmatprep.subr.mxu0 0.0
        %936 = vmatpush2.msra.mxu0 0.0
        %937 = vmatprep.subr.mxu0 0.0
        %938 = vmatpush2.msra.mxu0 0.0
        %939 = vmatprep.subr.mxu0 0.0
        %940 = vmatpush2.msra.mxu0 0.0
        %941 = vmatprep.mubr.f32.mxu0 0.0
        %942 = vmatmul.mubr.f32.gmra.mxu0 %v872
        %v943 = vpop.f32.mrf.mxu0
        %v944 = vadd.f32 %v868, %v943
        %v945 = vpop.f32.mrf.mxu0
        %946 = vmatprep.mubr.f32.mxu0 0.0
        %947 = vmatmul.mubr.f32.gmra.mxu0 %v875
        %v948 = vpop.f32.mrf.mxu0
        %v949 = vadd.f32 %v868, %v948
        %v950 = vpop.f32.mrf.mxu0
        %951 = vdwg.mxu0
        %v952 = vld [vmem:[%s677] sm:$0xff]
        %v953 = vld [vmem:[%s677 + $0x8] sm:$0xff]
        %v954 = vld [vmem:[%s3] sm:$0xff]
        %v955 = vld [vmem:[%s3 + $0x8] sm:$0xff]
        %v956 = vld [vmem:[%s3 + $0x10] sm:$0x7f]
        %v957 = vld [vmem:[%s4] sm:$0x1]
        %v959 = vlaneseq
        %v960 = vshrl.u32 %v959, 7
        %v961 = vsub.s32 0, %v960
        %v962 = vrot.slane %v957, %v961
        %vm964 = vcmask 187392
        %v966 = vsel %vm964, %v952, 0
        %v969 = vsel %vm964, %v953, 0
        %vm971 = vcmask 1046528
        %v973 = vsel %vm971, %v956, 0
        %975 = vmatprep.subr.mxu0 0.0
        %976 = vmatpush1.msra.mxu0 0.0
        %977 = vmatprep.subr.mxu0 0.0
        %978 = vmatpush1.msra.mxu0 0.0
        %979 = vmatprep.subr.mxu0 0.0
        %980 = vmatpush1.msra.mxu0 0.0
        %981 = vmatprep.subr.mxu0 0.0
        %982 = vmatpush1.msra.mxu0 0.0
        %983 = vmatprep.subr.mxu0 0.0
        %984 = vmatpush1.msra.mxu0 0.0
        %985 = vmatprep.subr.mxu0 0.0
        %986 = vmatpush1.msra.mxu0 0.0
        %987 = vmatprep.subr.mxu0 0.0
        %988 = vmatpush1.msra.mxu0 0.0
        %989 = vmatprep.subr.mxu0 0.0
        %990 = vmatpush1.msra.mxu0 0.0
        %991 = vmatprep.subr.mxu0 0.0
        %992 = vmatpush1.msra.mxu0 0.0
        %993 = vmatprep.subr.mxu0 0.0
        %994 = vmatpush1.msra.mxu0 0.0
        %995 = vmatprep.subr.mxu0 0.0
        %996 = vmatpush1.msra.mxu0 0.0
        %997 = vmatprep.subr.mxu0 0.0
        %998 = vmatpush1.msra.mxu0 0.0
        %999 = vmatprep.subr.mxu0 0.0
        %1000 = vmatpush1.msra.mxu0 0.0
        %1001 = vmatprep.subr.mxu0 0.0
        %1002 = vmatpush1.msra.mxu0 %v973
        %1003 = vmatprep.subr.mxu0 0.0
        %1004 = vmatpush1.msra.mxu0 %v955
        %1005 = vmatprep.subr.mxu0 0.0
        %1006 = vmatpush1.msra.mxu0 %v954
        %1007 = vmatprep.subr.mxu0 0.0
        %1008 = vmatpush2.msra.mxu0 0.0
        %1009 = vmatprep.subr.mxu0 0.0
        %1010 = vmatpush2.msra.mxu0 0.0
        %1011 = vmatprep.subr.mxu0 0.0
        %1012 = vmatpush2.msra.mxu0 0.0
        %1013 = vmatprep.subr.mxu0 0.0
        %1014 = vmatpush2.msra.mxu0 0.0
        %1015 = vmatprep.subr.mxu0 0.0
        %1016 = vmatpush2.msra.mxu0 0.0
        %1017 = vmatprep.subr.mxu0 0.0
        %1018 = vmatpush2.msra.mxu0 0.0
        %1019 = vmatprep.subr.mxu0 0.0
        %1020 = vmatpush2.msra.mxu0 0.0
        %1021 = vmatprep.subr.mxu0 0.0
        %1022 = vmatpush2.msra.mxu0 0.0
        %1023 = vmatprep.subr.mxu0 0.0
        %1024 = vmatpush2.msra.mxu0 0.0
        %1025 = vmatprep.subr.mxu0 0.0
        %1026 = vmatpush2.msra.mxu0 0.0
        %1027 = vmatprep.subr.mxu0 0.0
        %1028 = vmatpush2.msra.mxu0 0.0
        %1029 = vmatprep.subr.mxu0 0.0
        %1030 = vmatpush2.msra.mxu0 0.0
        %1031 = vmatprep.subr.mxu0 0.0
        %1032 = vmatpush2.msra.mxu0 0.0
        %1033 = vmatprep.subr.mxu0 0.0
        %1034 = vmatpush2.msra.mxu0 0.0
        %1035 = vmatprep.subr.mxu0 0.0
        %1036 = vmatpush2.msra.mxu0 0.0
        %1037 = vmatprep.subr.mxu0 0.0
        %1038 = vmatpush2.msra.mxu0 0.0
        %1039 = vmatprep.mubr.f32.mxu0 0.0
        %1040 = vmatmul.mubr.f32.gmra.mxu0 %v966
        %v1041 = vpop.f32.mrf.mxu0
        %v1042 = vadd.f32 %v962, %v1041
        %v1043 = vpop.f32.mrf.mxu0
        %1044 = vmatprep.mubr.f32.mxu0 0.0
        %1045 = vmatmul.mubr.f32.gmra.mxu0 %v969
        %v1046 = vpop.f32.mrf.mxu0
        %v1047 = vadd.f32 %v962, %v1046
        %v1048 = vpop.f32.mrf.mxu0
        %1049 = vdwg.mxu0
        %v1050 = vmax.f32 %v1042, 0.0
        %v1051 = vmax.f32 %v1047, 0.0
        %v1052 = vld [vmem:[%s7] sm:$0xff]
        %v1053 = vld [vmem:[%s7 + $0x8] sm:$0xff]
        %v1054 = vld [vmem:[%s8] sm:$0x1]
        %v1056 = vlaneseq
        %v1057 = vshrl.u32 %v1056, 7
        %v1058 = vsub.s32 0, %v1057
        %v1059 = vrot.slane %v1054, %v1058
        %v1062 = vsel %vm870, %v1050, 0
        %v1065 = vsel %vm870, %v1051, 0
        %1067 = vmatprep.subr.mxu0 0.0
        %1068 = vmatpush1.msra.mxu0 0.0
        %1069 = vmatprep.subr.mxu0 0.0
        %1070 = vmatpush1.msra.mxu0 0.0
        %1071 = vmatprep.subr.mxu0 0.0
        %1072 = vmatpush1.msra.mxu0 0.0
        %1073 = vmatprep.subr.mxu0 0.0
        %1074 = vmatpush1.msra.mxu0 0.0
        %1075 = vmatprep.subr.mxu0 0.0
        %1076 = vmatpush1.msra.mxu0 0.0
        %1077 = vmatprep.subr.mxu0 0.0
        %1078 = vmatpush1.msra.mxu0 0.0
        %1079 = vmatprep.subr.mxu0 0.0
        %1080 = vmatpush1.msra.mxu0 0.0
        %1081 = vmatprep.subr.mxu0 0.0
        %1082 = vmatpush1.msra.mxu0 0.0
        %1083 = vmatprep.subr.mxu0 0.0
        %1084 = vmatpush1.msra.mxu0 0.0
        %1085 = vmatprep.subr.mxu0 0.0
        %1086 = vmatpush1.msra.mxu0 0.0
        %1087 = vmatprep.subr.mxu0 0.0
        %1088 = vmatpush1.msra.mxu0 0.0
        %1089 = vmatprep.subr.mxu0 0.0
        %1090 = vmatpush1.msra.mxu0 0.0
        %1091 = vmatprep.subr.mxu0 0.0
        %1092 = vmatpush1.msra.mxu0 0.0
        %1093 = vmatprep.subr.mxu0 0.0
        %1094 = vmatpush1.msra.mxu0 0.0
        %1095 = vmatprep.subr.mxu0 0.0
        %1096 = vmatpush1.msra.mxu0 %v1053
        %1097 = vmatprep.subr.mxu0 0.0
        %1098 = vmatpush1.msra.mxu0 %v1052
        %1099 = vmatprep.subr.mxu0 0.0
        %1100 = vmatpush2.msra.mxu0 0.0
        %1101 = vmatprep.subr.mxu0 0.0
        %1102 = vmatpush2.msra.mxu0 0.0
        %1103 = vmatprep.subr.mxu0 0.0
        %1104 = vmatpush2.msra.mxu0 0.0
        %1105 = vmatprep.subr.mxu0 0.0
        %1106 = vmatpush2.msra.mxu0 0.0
        %1107 = vmatprep.subr.mxu0 0.0
        %1108 = vmatpush2.msra.mxu0 0.0
        %1109 = vmatprep.subr.mxu0 0.0
        %1110 = vmatpush2.msra.mxu0 0.0
        %1111 = vmatprep.subr.mxu0 0.0
        %1112 = vmatpush2.msra.mxu0 0.0
        %1113 = vmatprep.subr.mxu0 0.0
        %1114 = vmatpush2.msra.mxu0 0.0
        %1115 = vmatprep.subr.mxu0 0.0
        %1116 = vmatpush2.msra.mxu0 0.0
        %1117 = vmatprep.subr.mxu0 0.0
        %1118 = vmatpush2.msra.mxu0 0.0
        %1119 = vmatprep.subr.mxu0 0.0
        %1120 = vmatpush2.msra.mxu0 0.0
        %1121 = vmatprep.subr.mxu0 0.0
        %1122 = vmatpush2.msra.mxu0 0.0
        %1123 = vmatprep.subr.mxu0 0.0
        %1124 = vmatpush2.msra.mxu0 0.0
        %1125 = vmatprep.subr.mxu0 0.0
        %1126 = vmatpush2.msra.mxu0 0.0
        %1127 = vmatprep.subr.mxu0 0.0
        %1128 = vmatpush2.msra.mxu0 0.0
        %1129 = vmatprep.subr.mxu0 0.0
        %1130 = vmatpush2.msra.mxu0 0.0
        %1131 = vmatprep.mubr.f32.mxu0 0.0
        %1132 = vmatmul.mubr.f32.gmra.mxu0 %v1062
        %v1133 = vpop.f32.mrf.mxu0
        %v1134 = vadd.f32 %v1059, %v1133
        %v1135 = vpop.f32.mrf.mxu0
        %1136 = vmatprep.mubr.f32.mxu0 0.0
        %1137 = vmatmul.mubr.f32.gmra.mxu0 %v1065
        %v1138 = vpop.f32.mrf.mxu0
        %v1139 = vadd.f32 %v1059, %v1138
        %v1140 = vpop.f32.mrf.mxu0
        %1141 = vdwg.mxu0
        %v1142 = vadd.f32 %v1134, %v944
        %v1143 = vadd.f32 %v1139, %v949
        %vm1144 = vcmp.gt.f32.partialorder %v1142, 0.0
        %vm1145 = vcmp.gt.f32.partialorder %v1143, 0.0
        %v1146 = vmul.f32 %v1142, 0.2
        %v1147 = vmul.f32 %v1143, 0.2
        %v1148 = vsel %vm1144, %v1142, %v1146
        %v1149 = vsel %vm1145, %v1143, %v1147
        %v1150 = vld [vmem:[%s11] sm:$0xff]
        %v1151 = vld [vmem:[%s11 + $0x8] sm:$0xff]
        %v1152 = vld [vmem:[%s11 + $0x10] sm:$0xff]
        %v1153 = vld [vmem:[%s11 + $0x18] sm:$0xff]
        %v1154 = vld [vmem:[%s11 + $0x20] sm:$0xff]
        %v1155 = vld [vmem:[%s11 + $0x28] sm:$0xff]
        %v1156 = vld [vmem:[%s11 + $0x30] sm:$0xff]
        %v1157 = vld [vmem:[%s11 + $0x38] sm:$0xff]
        %v1158 = vld [vmem:[%s11 + $0x40] sm:$0xff]
        %v1159 = vld [vmem:[%s11 + $0x48] sm:$0xff]
        %vm1160 = vcmask 654336
        %v1162 = vsel %vm1160, %v1148, 0
        %v1165 = vsel %vm1160, %v1149, 0
        %1167 = vmatprep.subr.mxu0 0.0
        %1168 = vmatpush1.msra.mxu0 0.0
        %1169 = vmatprep.subr.mxu0 0.0
        %1170 = vmatpush1.msra.mxu0 0.0
        %1171 = vmatprep.subr.mxu0 0.0
        %1172 = vmatpush1.msra.mxu0 0.0
        %1173 = vmatprep.subr.mxu0 0.0
        %1174 = vmatpush1.msra.mxu0 0.0
        %1175 = vmatprep.subr.mxu0 0.0
        %1176 = vmatpush1.msra.mxu0 0.0
        %1177 = vmatprep.subr.mxu0 0.0
        %1178 = vmatpush1.msra.mxu0 0.0
        %1179 = vmatprep.subr.mxu0 0.0
        %1180 = vmatpush1.msra.mxu0 %v1159
        %1181 = vmatprep.subr.mxu0 0.0
        %1182 = vmatpush1.msra.mxu0 %v1158
        %1183 = vmatprep.subr.mxu0 0.0
        %1184 = vmatpush1.msra.mxu0 %v1157
        %1185 = vmatprep.subr.mxu0 0.0
        %1186 = vmatpush1.msra.mxu0 %v1156
        %1187 = vmatprep.subr.mxu0 0.0
        %1188 = vmatpush1.msra.mxu0 %v1155
        %1189 = vmatprep.subr.mxu0 0.0
        %1190 = vmatpush1.msra.mxu0 %v1154
        %1191 = vmatprep.subr.mxu0 0.0
        %1192 = vmatpush1.msra.mxu0 %v1153
        %1193 = vmatprep.subr.mxu0 0.0
        %1194 = vmatpush1.msra.mxu0 %v1152
        %1195 = vmatprep.subr.mxu0 0.0
        %1196 = vmatpush1.msra.mxu0 %v1151
        %1197 = vmatprep.subr.mxu0 0.0
        %1198 = vmatpush1.msra.mxu0 %v1150
        %1199 = vmatprep.subr.mxu0 0.0
        %1200 = vmatpush2.msra.mxu0 0.0
        %1201 = vmatprep.subr.mxu0 0.0
        %1202 = vmatpush2.msra.mxu0 0.0
        %1203 = vmatprep.subr.mxu0 0.0
        %1204 = vmatpush2.msra.mxu0 0.0
        %1205 = vmatprep.subr.mxu0 0.0
        %1206 = vmatpush2.msra.mxu0 0.0
        %1207 = vmatprep.subr.mxu0 0.0
        %1208 = vmatpush2.msra.mxu0 0.0
        %1209 = vmatprep.subr.mxu0 0.0
        %1210 = vmatpush2.msra.mxu0 0.0
        %1211 = vmatprep.subr.mxu0 0.0
        %1212 = vmatpush2.msra.mxu0 0.0
        %1213 = vmatprep.subr.mxu0 0.0
        %1214 = vmatpush2.msra.mxu0 0.0
        %1215 = vmatprep.subr.mxu0 0.0
        %1216 = vmatpush2.msra.mxu0 0.0
        %1217 = vmatprep.subr.mxu0 0.0
        %1218 = vmatpush2.msra.mxu0 0.0
        %1219 = vmatprep.subr.mxu0 0.0
        %1220 = vmatpush2.msra.mxu0 0.0
        %1221 = vmatprep.subr.mxu0 0.0
        %1222 = vmatpush2.msra.mxu0 0.0
        %1223 = vmatprep.subr.mxu0 0.0
        %1224 = vmatpush2.msra.mxu0 0.0
        %1225 = vmatprep.subr.mxu0 0.0
        %1226 = vmatpush2.msra.mxu0 0.0
        %1227 = vmatprep.subr.mxu0 0.0
        %1228 = vmatpush2.msra.mxu0 0.0
        %1229 = vmatprep.subr.mxu0 0.0
        %1230 = vmatpush2.msra.mxu0 0.0
        %1231 = vmatprep.mubr.f32.mxu0 0.0
        %1232 = vmatmul.mubr.f32.gmra.mxu0 %v1162
        %v1233 = vpop.f32.mrf.mxu0
        %v1234 = vadd.f32 0.0, %v1233
        %v1235 = vpop.f32.mrf.mxu0
        %1236 = vmatprep.mubr.f32.mxu0 0.0
        %1237 = vmatmul.mubr.f32.gmra.mxu0 %v1165
        %v1238 = vpop.f32.mrf.mxu0
        %v1239 = vadd.f32 0.0, %v1238
        %v1240 = vpop.f32.mrf.mxu0
        %1241 = vdwg.mxu0
        %v1242 = vld [vmem:[%s684] sm:$0xff]
        %v1243 = vld [vmem:[%s684 + $0x8] sm:$0xff]
        %vm1244 = vcmp.gt.f32.partialorder %v1242, 0.0
        %vm1245 = vcmp.gt.f32.partialorder %v1243, 0.0
        %v1246 = vsel %vm1244, 1, 0
        %v1247 = vsel %vm1245, 1, 0
        %1248 = vset.pattern.permute.xlu0 0
        %1249 = vperm.xlu0 %1248, %v1246
        %v1250 = vpop.permute.xlu0 %1249
        %1251 = vset.pattern.permute.xlu0 0
        %1252 = vperm.xlu0 %1251, %v1247
        %v1253 = vpop.permute.xlu0 %1252
        %vm1254 = vcmp.eq.s32.totalorder %v1250, 1
        %vm1255 = vcmp.eq.s32.totalorder %v1253, 1
        %v1256 = vsel %vm1254, %v1234, -1e+30
        %v1257 = vsel %vm1255, %v1239, -1e+30
        %s1258 = scalar_lea.vmem %s677, 16 [#allocation2]
        %v1259 = vld [vmem:[%s1258] sm:$0xff]
        %v1260 = vld [vmem:[%s1258 + $0x8] sm:$0xff]
        %v1262 = vsel %vm964, %v1259, 0
        %v1265 = vsel %vm964, %v1260, 0
        %1267 = vmatprep.subr.mxu0 0.0
        %1268 = vmatpush1.msra.mxu0 0.0
        %1269 = vmatprep.subr.mxu0 0.0
        %1270 = vmatpush1.msra.mxu0 0.0
        %1271 = vmatprep.subr.mxu0 0.0
        %1272 = vmatpush1.msra.mxu0 0.0
        %1273 = vmatprep.subr.mxu0 0.0
        %1274 = vmatpush1.msra.mxu0 0.0
        %1275 = vmatprep.subr.mxu0 0.0
        %1276 = vmatpush1.msra.mxu0 0.0
        %1277 = vmatprep.subr.mxu0 0.0
        %1278 = vmatpush1.msra.mxu0 0.0
        %1279 = vmatprep.subr.mxu0 0.0
        %1280 = vmatpush1.msra.mxu0 0.0
        %1281 = vmatprep.subr.mxu0 0.0
        %1282 = vmatpush1.msra.mxu0 0.0
        %1283 = vmatprep.subr.mxu0 0.0
        %1284 = vmatpush1.msra.mxu0 0.0
        %1285 = vmatprep.subr.mxu0 0.0
        %1286 = vmatpush1.msra.mxu0 0.0
        %1287 = vmatprep.subr.mxu0 0.0
        %1288 = vmatpush1.msra.mxu0 0.0
        %1289 = vmatprep.subr.mxu0 0.0
        %1290 = vmatpush1.msra.mxu0 0.0
        %1291 = vmatprep.subr.mxu0 0.0
        %1292 = vmatpush1.msra.mxu0 0.0
        %1293 = vmatprep.subr.mxu0 0.0
        %1294 = vmatpush1.msra.mxu0 %v973
        %1295 = vmatprep.subr.mxu0 0.0
        %1296 = vmatpush1.msra.mxu0 %v955
        %1297 = vmatprep.subr.mxu0 0.0
        %1298 = vmatpush1.msra.mxu0 %v954
        %1299 = vmatprep.subr.mxu0 0.0
        %1300 = vmatpush2.msra.mxu0 0.0
        %1301 = vmatprep.subr.mxu0 0.0
        %1302 = vmatpush2.msra.mxu0 0.0
        %1303 = vmatprep.subr.mxu0 0.0
        %1304 = vmatpush2.msra.mxu0 0.0
        %1305 = vmatprep.subr.mxu0 0.0
        %1306 = vmatpush2.msra.mxu0 0.0
        %1307 = vmatprep.subr.mxu0 0.0
        %1308 = vmatpush2.msra.mxu0 0.0
        %1309 = vmatprep.subr.mxu0 0.0
        %1310 = vmatpush2.msra.mxu0 0.0
        %1311 = vmatprep.subr.mxu0 0.0
        %1312 = vmatpush2.msra.mxu0 0.0
        %1313 = vmatprep.subr.mxu0 0.0
        %1314 = vmatpush2.msra.mxu0 0.0
        %1315 = vmatprep.subr.mxu0 0.0
        %1316 = vmatpush2.msra.mxu0 0.0
        %1317 = vmatprep.subr.mxu0 0.0
        %1318 = vmatpush2.msra.mxu0 0.0
        %1319 = vmatprep.subr.mxu0 0.0
        %1320 = vmatpush2.msra.mxu0 0.0
        %1321 = vmatprep.subr.mxu0 0.0
        %1322 = vmatpush2.msra.mxu0 0.0
        %1323 = vmatprep.subr.mxu0 0.0
        %1324 = vmatpush2.msra.mxu0 0.0
        %1325 = vmatprep.subr.mxu0 0.0
        %1326 = vmatpush2.msra.mxu0 0.0
        %1327 = vmatprep.subr.mxu0 0.0
        %1328 = vmatpush2.msra.mxu0 0.0
        %1329 = vmatprep.subr.mxu0 0.0
        %1330 = vmatpush2.msra.mxu0 0.0
        %1331 = vmatprep.mubr.f32.mxu0 0.0
        %1332 = vmatmul.mubr.f32.gmra.mxu0 %v1262
        %v1333 = vpop.f32.mrf.mxu0
        %v1334 = vadd.f32 %v962, %v1333
        %v1335 = vpop.f32.mrf.mxu0
        %1336 = vmatprep.mubr.f32.mxu0 0.0
        %1337 = vmatmul.mubr.f32.gmra.mxu0 %v1265
        %v1338 = vpop.f32.mrf.mxu0
        %v1339 = vadd.f32 %v962, %v1338
        %v1340 = vpop.f32.mrf.mxu0
        %1341 = vdwg.mxu0
        %v1342 = vmax.f32 %v1334, 0.0
        %v1343 = vmax.f32 %v1339, 0.0
        %v1345 = vsel %vm870, %v1342, 0
        %v1348 = vsel %vm870, %v1343, 0
        %1350 = vmatprep.subr.mxu0 0.0
        %1351 = vmatpush1.msra.mxu0 0.0
        %1352 = vmatprep.subr.mxu0 0.0
        %1353 = vmatpush1.msra.mxu0 0.0
        %1354 = vmatprep.subr.mxu0 0.0
        %1355 = vmatpush1.msra.mxu0 0.0
        %1356 = vmatprep.subr.mxu0 0.0
        %1357 = vmatpush1.msra.mxu0 0.0
        %1358 = vmatprep.subr.mxu0 0.0
        %1359 = vmatpush1.msra.mxu0 0.0
        %1360 = vmatprep.subr.mxu0 0.0
        %1361 = vmatpush1.msra.mxu0 0.0
        %1362 = vmatprep.subr.mxu0 0.0
        %1363 = vmatpush1.msra.mxu0 0.0
        %1364 = vmatprep.subr.mxu0 0.0
        %1365 = vmatpush1.msra.mxu0 0.0
        %1366 = vmatprep.subr.mxu0 0.0
        %1367 = vmatpush1.msra.mxu0 0.0
        %1368 = vmatprep.subr.mxu0 0.0
        %1369 = vmatpush1.msra.mxu0 0.0
        %1370 = vmatprep.subr.mxu0 0.0
        %1371 = vmatpush1.msra.mxu0 0.0
        %1372 = vmatprep.subr.mxu0 0.0
        %1373 = vmatpush1.msra.mxu0 0.0
        %1374 = vmatprep.subr.mxu0 0.0
        %1375 = vmatpush1.msra.mxu0 0.0
        %1376 = vmatprep.subr.mxu0 0.0
        %1377 = vmatpush1.msra.mxu0 0.0
        %1378 = vmatprep.subr.mxu0 0.0
        %1379 = vmatpush1.msra.mxu0 %v1053
        %1380 = vmatprep.subr.mxu0 0.0
        %1381 = vmatpush1.msra.mxu0 %v1052
        %1382 = vmatprep.subr.mxu0 0.0
        %1383 = vmatpush2.msra.mxu0 0.0
        %1384 = vmatprep.subr.mxu0 0.0
        %1385 = vmatpush2.msra.mxu0 0.0
        %1386 = vmatprep.subr.mxu0 0.0
        %1387 = vmatpush2.msra.mxu0 0.0
        %1388 = vmatprep.subr.mxu0 0.0
        %1389 = vmatpush2.msra.mxu0 0.0
        %1390 = vmatprep.subr.mxu0 0.0
        %1391 = vmatpush2.msra.mxu0 0.0
        %1392 = vmatprep.subr.mxu0 0.0
        %1393 = vmatpush2.msra.mxu0 0.0
        %1394 = vmatprep.subr.mxu0 0.0
        %1395 = vmatpush2.msra.mxu0 0.0
        %1396 = vmatprep.subr.mxu0 0.0
        %1397 = vmatpush2.msra.mxu0 0.0
        %1398 = vmatprep.subr.mxu0 0.0
        %1399 = vmatpush2.msra.mxu0 0.0
        %1400 = vmatprep.subr.mxu0 0.0
        %1401 = vmatpush2.msra.mxu0 0.0
        %1402 = vmatprep.subr.mxu0 0.0
        %1403 = vmatpush2.msra.mxu0 0.0
        %1404 = vmatprep.subr.mxu0 0.0
        %1405 = vmatpush2.msra.mxu0 0.0
        %1406 = vmatprep.subr.mxu0 0.0
        %1407 = vmatpush2.msra.mxu0 0.0
        %1408 = vmatprep.subr.mxu0 0.0
        %1409 = vmatpush2.msra.mxu0 0.0
        %1410 = vmatprep.subr.mxu0 0.0
        %1411 = vmatpush2.msra.mxu0 0.0
        %1412 = vmatprep.subr.mxu0 0.0
        %1413 = vmatpush2.msra.mxu0 0.0
        %1414 = vmatprep.mubr.f32.mxu0 0.0
        %1415 = vmatmul.mubr.f32.gmra.mxu0 %v1345
        %v1416 = vpop.f32.mrf.mxu0
        %v1417 = vadd.f32 %v1059, %v1416
        %v1418 = vpop.f32.mrf.mxu0
        %1419 = vmatprep.mubr.f32.mxu0 0.0
        %1420 = vmatmul.mubr.f32.gmra.mxu0 %v1348
        %v1421 = vpop.f32.mrf.mxu0
        %v1422 = vadd.f32 %v1059, %v1421
        %v1423 = vpop.f32.mrf.mxu0
        %1424 = vdwg.mxu0
        %v1425 = vadd.f32 %v1417, %v944
        %v1426 = vadd.f32 %v1422, %v949
        %vm1427 = vcmp.gt.f32.partialorder %v1425, 0.0
        %vm1428 = vcmp.gt.f32.partialorder %v1426, 0.0
        %v1429 = vmul.f32 %v1425, 0.2
        %v1430 = vmul.f32 %v1426, 0.2
        %v1431 = vsel %vm1427, %v1425, %v1429
        %v1432 = vsel %vm1428, %v1426, %v1430
        %v1434 = vsel %vm1160, %v1431, 0
        %v1437 = vsel %vm1160, %v1432, 0
        %1439 = vmatprep.subr.mxu0 0.0
        %1440 = vmatpush1.msra.mxu0 0.0
        %1441 = vmatprep.subr.mxu0 0.0
        %1442 = vmatpush1.msra.mxu0 0.0
        %1443 = vmatprep.subr.mxu0 0.0
        %1444 = vmatpush1.msra.mxu0 0.0
        %1445 = vmatprep.subr.mxu0 0.0
        %1446 = vmatpush1.msra.mxu0 0.0
        %1447 = vmatprep.subr.mxu0 0.0
        %1448 = vmatpush1.msra.mxu0 0.0
        %1449 = vmatprep.subr.mxu0 0.0
        %1450 = vmatpush1.msra.mxu0 0.0
        %1451 = vmatprep.subr.mxu0 0.0
        %1452 = vmatpush1.msra.mxu0 %v1159
        %1453 = vmatprep.subr.mxu0 0.0
        %1454 = vmatpush1.msra.mxu0 %v1158
        %1455 = vmatprep.subr.mxu0 0.0
        %1456 = vmatpush1.msra.mxu0 %v1157
        %1457 = vmatprep.subr.mxu0 0.0
        %1458 = vmatpush1.msra.mxu0 %v1156
        %1459 = vmatprep.subr.mxu0 0.0
        %1460 = vmatpush1.msra.mxu0 %v1155
        %1461 = vmatprep.subr.mxu0 0.0
        %1462 = vmatpush1.msra.mxu0 %v1154
        %1463 = vmatprep.subr.mxu0 0.0
        %1464 = vmatpush1.msra.mxu0 %v1153
        %1465 = vmatprep.subr.mxu0 0.0
        %1466 = vmatpush1.msra.mxu0 %v1152
        %1467 = vmatprep.subr.mxu0 0.0
        %1468 = vmatpush1.msra.mxu0 %v1151
        %1469 = vmatprep.subr.mxu0 0.0
        %1470 = vmatpush1.msra.mxu0 %v1150
        %1471 = vmatprep.subr.mxu0 0.0
        %1472 = vmatpush2.msra.mxu0 0.0
        %1473 = vmatprep.subr.mxu0 0.0
        %1474 = vmatpush2.msra.mxu0 0.0
        %1475 = vmatprep.subr.mxu0 0.0
        %1476 = vmatpush2.msra.mxu0 0.0
        %1477 = vmatprep.subr.mxu0 0.0
        %1478 = vmatpush2.msra.mxu0 0.0
        %1479 = vmatprep.subr.mxu0 0.0
        %1480 = vmatpush2.msra.mxu0 0.0
        %1481 = vmatprep.subr.mxu0 0.0
        %1482 = vmatpush2.msra.mxu0 0.0
        %1483 = vmatprep.subr.mxu0 0.0
        %1484 = vmatpush2.msra.mxu0 0.0
        %1485 = vmatprep.subr.mxu0 0.0
        %1486 = vmatpush2.msra.mxu0 0.0
        %1487 = vmatprep.subr.mxu0 0.0
        %1488 = vmatpush2.msra.mxu0 0.0
        %1489 = vmatprep.subr.mxu0 0.0
        %1490 = vmatpush2.msra.mxu0 0.0
        %1491 = vmatprep.subr.mxu0 0.0
        %1492 = vmatpush2.msra.mxu0 0.0
        %1493 = vmatprep.subr.mxu0 0.0
        %1494 = vmatpush2.msra.mxu0 0.0
        %1495 = vmatprep.subr.mxu0 0.0
        %1496 = vmatpush2.msra.mxu0 0.0
        %1497 = vmatprep.subr.mxu0 0.0
        %1498 = vmatpush2.msra.mxu0 0.0
        %1499 = vmatprep.subr.mxu0 0.0
        %1500 = vmatpush2.msra.mxu0 0.0
        %1501 = vmatprep.subr.mxu0 0.0
        %1502 = vmatpush2.msra.mxu0 0.0
        %1503 = vmatprep.mubr.f32.mxu0 0.0
        %1504 = vmatmul.mubr.f32.gmra.mxu0 %v1434
        %v1505 = vpop.f32.mrf.mxu0
        %v1506 = vadd.f32 0.0, %v1505
        %v1507 = vpop.f32.mrf.mxu0
        %1508 = vmatprep.mubr.f32.mxu0 0.0
        %1509 = vmatmul.mubr.f32.gmra.mxu0 %v1437
        %v1510 = vpop.f32.mrf.mxu0
        %v1511 = vadd.f32 0.0, %v1510
        %v1512 = vpop.f32.mrf.mxu0
        %1513 = vdwg.mxu0
        %s1514 = scalar_lea.vmem %s684, 16 [#allocation3]
        %v1515 = vld [vmem:[%s1514] sm:$0xff]
        %v1516 = vld [vmem:[%s1514 + $0x8] sm:$0xff]
        %vm1517 = vcmp.gt.f32.partialorder %v1515, 0.0
        %vm1518 = vcmp.gt.f32.partialorder %v1516, 0.0
        %v1519 = vsel %vm1517, 1, 0
        %v1520 = vsel %vm1518, 1, 0
        %1521 = vset.pattern.permute.xlu0 0
        %1522 = vperm.xlu0 %1521, %v1519
        %v1523 = vpop.permute.xlu0 %1522
        %1524 = vset.pattern.permute.xlu0 0
        %1525 = vperm.xlu0 %1524, %v1520
        %v1526 = vpop.permute.xlu0 %1525
        %vm1527 = vcmp.eq.s32.totalorder %v1523, 1
        %vm1528 = vcmp.eq.s32.totalorder %v1526, 1
        %v1529 = vsel %vm1527, %v1506, -1e+30
        %v1530 = vsel %vm1528, %v1511, -1e+30
        %s1531 = scalar_lea.vmem %s677, 32 [#allocation2]
        %v1532 = vld [vmem:[%s1531] sm:$0xff]
        %v1533 = vld [vmem:[%s1531 + $0x8] sm:$0xff]
        %v1535 = vsel %vm964, %v1532, 0
        %v1538 = vsel %vm964, %v1533, 0
        %1540 = vmatprep.subr.mxu0 0.0
        %1541 = vmatpush1.msra.mxu0 0.0
        %1542 = vmatprep.subr.mxu0 0.0
        %1543 = vmatpush1.msra.mxu0 0.0
        %1544 = vmatprep.subr.mxu0 0.0
        %1545 = vmatpush1.msra.mxu0 0.0
        %1546 = vmatprep.subr.mxu0 0.0
        %1547 = vmatpush1.msra.mxu0 0.0
        %1548 = vmatprep.subr.mxu0 0.0
        %1549 = vmatpush1.msra.mxu0 0.0
        %1550 = vmatprep.subr.mxu0 0.0
        %1551 = vmatpush1.msra.mxu0 0.0
        %1552 = vmatprep.subr.mxu0 0.0
        %1553 = vmatpush1.msra.mxu0 0.0
        %1554 = vmatprep.subr.mxu0 0.0
        %1555 = vmatpush1.msra.mxu0 0.0
        %1556 = vmatprep.subr.mxu0 0.0
        %1557 = vmatpush1.msra.mxu0 0.0
        %1558 = vmatprep.subr.mxu0 0.0
        %1559 = vmatpush1.msra.mxu0 0.0
        %1560 = vmatprep.subr.mxu0 0.0
        %1561 = vmatpush1.msra.mxu0 0.0
        %1562 = vmatprep.subr.mxu0 0.0
        %1563 = vmatpush1.msra.mxu0 0.0
        %1564 = vmatprep.subr.mxu0 0.0
        %1565 = vmatpush1.msra.mxu0 0.0
        %1566 = vmatprep.subr.mxu0 0.0
        %1567 = vmatpush1.msra.mxu0 %v973
        %1568 = vmatprep.subr.mxu0 0.0
        %1569 = vmatpush1.msra.mxu0 %v955
        %1570 = vmatprep.subr.mxu0 0.0
        %1571 = vmatpush1.msra.mxu0 %v954
        %1572 = vmatprep.subr.mxu0 0.0
        %1573 = vmatpush2.msra.mxu0 0.0
        %1574 = vmatprep.subr.mxu0 0.0
        %1575 = vmatpush2.msra.mxu0 0.0
        %1576 = vmatprep.subr.mxu0 0.0
        %1577 = vmatpush2.msra.mxu0 0.0
        %1578 = vmatprep.subr.mxu0 0.0
        %1579 = vmatpush2.msra.mxu0 0.0
        %1580 = vmatprep.subr.mxu0 0.0
        %1581 = vmatpush2.msra.mxu0 0.0
        %1582 = vmatprep.subr.mxu0 0.0
        %1583 = vmatpush2.msra.mxu0 0.0
        %1584 = vmatprep.subr.mxu0 0.0
        %1585 = vmatpush2.msra.mxu0 0.0
        %1586 = vmatprep.subr.mxu0 0.0
        %1587 = vmatpush2.msra.mxu0 0.0
        %1588 = vmatprep.subr.mxu0 0.0
        %1589 = vmatpush2.msra.mxu0 0.0
        %1590 = vmatprep.subr.mxu0 0.0
        %1591 = vmatpush2.msra.mxu0 0.0
        %1592 = vmatprep.subr.mxu0 0.0
        %1593 = vmatpush2.msra.mxu0 0.0
        %1594 = vmatprep.subr.mxu0 0.0
        %1595 = vmatpush2.msra.mxu0 0.0
        %1596 = vmatprep.subr.mxu0 0.0
        %1597 = vmatpush2.msra.mxu0 0.0
        %1598 = vmatprep.subr.mxu0 0.0
        %1599 = vmatpush2.msra.mxu0 0.0
        %1600 = vmatprep.subr.mxu0 0.0
        %1601 = vmatpush2.msra.mxu0 0.0
        %1602 = vmatprep.subr.mxu0 0.0
        %1603 = vmatpush2.msra.mxu0 0.0
        %1604 = vmatprep.mubr.f32.mxu0 0.0
        %1605 = vmatmul.mubr.f32.gmra.mxu0 %v1535
        %v1606 = vpop.f32.mrf.mxu0
        %v1607 = vadd.f32 %v962, %v1606
        %v1608 = vpop.f32.mrf.mxu0
        %1609 = vmatprep.mubr.f32.mxu0 0.0
        %1610 = vmatmul.mubr.f32.gmra.mxu0 %v1538
        %v1611 = vpop.f32.mrf.mxu0
        %v1612 = vadd.f32 %v962, %v1611
        %v1613 = vpop.f32.mrf.mxu0
        %1614 = vdwg.mxu0
        %v1615 = vmax.f32 %v1607, 0.0
        %v1616 = vmax.f32 %v1612, 0.0
        %v1618 = vsel %vm870, %v1615, 0
        %v1621 = vsel %vm870, %v1616, 0
        %1623 = vmatprep.subr.mxu0 0.0
        %1624 = vmatpush1.msra.mxu0 0.0
        %1625 = vmatprep.subr.mxu0 0.0
        %1626 = vmatpush1.msra.mxu0 0.0
        %1627 = vmatprep.subr.mxu0 0.0
        %1628 = vmatpush1.msra.mxu0 0.0
        %1629 = vmatprep.subr.mxu0 0.0
        %1630 = vmatpush1.msra.mxu0 0.0
        %1631 = vmatprep.subr.mxu0 0.0
        %1632 = vmatpush1.msra.mxu0 0.0
        %1633 = vmatprep.subr.mxu0 0.0
        %1634 = vmatpush1.msra.mxu0 0.0
        %1635 = vmatprep.subr.mxu0 0.0
        %1636 = vmatpush1.msra.mxu0 0.0
        %1637 = vmatprep.subr.mxu0 0.0
        %1638 = vmatpush1.msra.mxu0 0.0
        %1639 = vmatprep.subr.mxu0 0.0
        %1640 = vmatpush1.msra.mxu0 0.0
        %1641 = vmatprep.subr.mxu0 0.0
        %1642 = vmatpush1.msra.mxu0 0.0
        %1643 = vmatprep.subr.mxu0 0.0
        %1644 = vmatpush1.msra.mxu0 0.0
        %1645 = vmatprep.subr.mxu0 0.0
        %1646 = vmatpush1.msra.mxu0 0.0
        %1647 = vmatprep.subr.mxu0 0.0
        %1648 = vmatpush1.msra.mxu0 0.0
        %1649 = vmatprep.subr.mxu0 0.0
        %1650 = vmatpush1.msra.mxu0 0.0
        %1651 = vmatprep.subr.mxu0 0.0
        %1652 = vmatpush1.msra.mxu0 %v1053
        %1653 = vmatprep.subr.mxu0 0.0
        %1654 = vmatpush1.msra.mxu0 %v1052
        %1655 = vmatprep.subr.mxu0 0.0
        %1656 = vmatpush2.msra.mxu0 0.0
        %1657 = vmatprep.subr.mxu0 0.0
        %1658 = vmatpush2.msra.mxu0 0.0
        %1659 = vmatprep.subr.mxu0 0.0
        %1660 = vmatpush2.msra.mxu0 0.0
        %1661 = vmatprep.subr.mxu0 0.0
        %1662 = vmatpush2.msra.mxu0 0.0
        %1663 = vmatprep.subr.mxu0 0.0
        %1664 = vmatpush2.msra.mxu0 0.0
        %1665 = vmatprep.subr.mxu0 0.0
        %1666 = vmatpush2.msra.mxu0 0.0
        %1667 = vmatprep.subr.mxu0 0.0
        %1668 = vmatpush2.msra.mxu0 0.0
        %1669 = vmatprep.subr.mxu0 0.0
        %1670 = vmatpush2.msra.mxu0 0.0
        %1671 = vmatprep.subr.mxu0 0.0
        %1672 = vmatpush2.msra.mxu0 0.0
        %1673 = vmatprep.subr.mxu0 0.0
        %1674 = vmatpush2.msra.mxu0 0.0
        %1675 = vmatprep.subr.mxu0 0.0
        %1676 = vmatpush2.msra.mxu0 0.0
        %1677 = vmatprep.subr.mxu0 0.0
        %1678 = vmatpush2.msra.mxu0 0.0
        %1679 = vmatprep.subr.mxu0 0.0
        %1680 = vmatpush2.msra.mxu0 0.0
        %1681 = vmatprep.subr.mxu0 0.0
        %1682 = vmatpush2.msra.mxu0 0.0
        %1683 = vmatprep.subr.mxu0 0.0
        %1684 = vmatpush2.msra.mxu0 0.0
        %1685 = vmatprep.subr.mxu0 0.0
        %1686 = vmatpush2.msra.mxu0 0.0
        %1687 = vmatprep.mubr.f32.mxu0 0.0
        %1688 = vmatmul.mubr.f32.gmra.mxu0 %v1618
        %v1689 = vpop.f32.mrf.mxu0
        %v1690 = vadd.f32 %v1059, %v1689
        %v1691 = vpop.f32.mrf.mxu0
        %1692 = vmatprep.mubr.f32.mxu0 0.0
        %1693 = vmatmul.mubr.f32.gmra.mxu0 %v1621
        %v1694 = vpop.f32.mrf.mxu0
        %v1695 = vadd.f32 %v1059, %v1694
        %v1696 = vpop.f32.mrf.mxu0
        %1697 = vdwg.mxu0
        %v1698 = vadd.f32 %v1690, %v944
        %v1699 = vadd.f32 %v1695, %v949
        %vm1700 = vcmp.gt.f32.partialorder %v1698, 0.0
        %vm1701 = vcmp.gt.f32.partialorder %v1699, 0.0
        %v1702 = vmul.f32 %v1698, 0.2
        %v1703 = vmul.f32 %v1699, 0.2
        %v1704 = vsel %vm1700, %v1698, %v1702
        %v1705 = vsel %vm1701, %v1699, %v1703
        %v1707 = vsel %vm1160, %v1704, 0
        %v1710 = vsel %vm1160, %v1705, 0
        %1712 = vmatprep.subr.mxu0 0.0
        %1713 = vmatpush1.msra.mxu0 0.0
        %1714 = vmatprep.subr.mxu0 0.0
        %1715 = vmatpush1.msra.mxu0 0.0
        %1716 = vmatprep.subr.mxu0 0.0
        %1717 = vmatpush1.msra.mxu0 0.0
        %1718 = vmatprep.subr.mxu0 0.0
        %1719 = vmatpush1.msra.mxu0 0.0
        %1720 = vmatprep.subr.mxu0 0.0
        %1721 = vmatpush1.msra.mxu0 0.0
        %1722 = vmatprep.subr.mxu0 0.0
        %1723 = vmatpush1.msra.mxu0 0.0
        %1724 = vmatprep.subr.mxu0 0.0
        %1725 = vmatpush1.msra.mxu0 %v1159
        %1726 = vmatprep.subr.mxu0 0.0
        %1727 = vmatpush1.msra.mxu0 %v1158
        %1728 = vmatprep.subr.mxu0 0.0
        %1729 = vmatpush1.msra.mxu0 %v1157
        %1730 = vmatprep.subr.mxu0 0.0
        %1731 = vmatpush1.msra.mxu0 %v1156
        %1732 = vmatprep.subr.mxu0 0.0
        %1733 = vmatpush1.msra.mxu0 %v1155
        %1734 = vmatprep.subr.mxu0 0.0
        %1735 = vmatpush1.msra.mxu0 %v1154
        %1736 = vmatprep.subr.mxu0 0.0
        %1737 = vmatpush1.msra.mxu0 %v1153
        %1738 = vmatprep.subr.mxu0 0.0
        %1739 = vmatpush1.msra.mxu0 %v1152
        %1740 = vmatprep.subr.mxu0 0.0
        %1741 = vmatpush1.msra.mxu0 %v1151
        %1742 = vmatprep.subr.mxu0 0.0
        %1743 = vmatpush1.msra.mxu0 %v1150
        %1744 = vmatprep.subr.mxu0 0.0
        %1745 = vmatpush2.msra.mxu0 0.0
        %1746 = vmatprep.subr.mxu0 0.0
        %1747 = vmatpush2.msra.mxu0 0.0
        %1748 = vmatprep.subr.mxu0 0.0
        %1749 = vmatpush2.msra.mxu0 0.0
        %1750 = vmatprep.subr.mxu0 0.0
        %1751 = vmatpush2.msra.mxu0 0.0
        %1752 = vmatprep.subr.mxu0 0.0
        %1753 = vmatpush2.msra.mxu0 0.0
        %1754 = vmatprep.subr.mxu0 0.0
        %1755 = vmatpush2.msra.mxu0 0.0
        %1756 = vmatprep.subr.mxu0 0.0
        %1757 = vmatpush2.msra.mxu0 0.0
        %1758 = vmatprep.subr.mxu0 0.0
        %1759 = vmatpush2.msra.mxu0 0.0
        %1760 = vmatprep.subr.mxu0 0.0
        %1761 = vmatpush2.msra.mxu0 0.0
        %1762 = vmatprep.subr.mxu0 0.0
        %1763 = vmatpush2.msra.mxu0 0.0
        %1764 = vmatprep.subr.mxu0 0.0
        %1765 = vmatpush2.msra.mxu0 0.0
        %1766 = vmatprep.subr.mxu0 0.0
        %1767 = vmatpush2.msra.mxu0 0.0
        %1768 = vmatprep.subr.mxu0 0.0
        %1769 = vmatpush2.msra.mxu0 0.0
        %1770 = vmatprep.subr.mxu0 0.0
        %1771 = vmatpush2.msra.mxu0 0.0
        %1772 = vmatprep.subr.mxu0 0.0
        %1773 = vmatpush2.msra.mxu0 0.0
        %1774 = vmatprep.subr.mxu0 0.0
        %1775 = vmatpush2.msra.mxu0 0.0
        %1776 = vmatprep.mubr.f32.mxu0 0.0
        %1777 = vmatmul.mubr.f32.gmra.mxu0 %v1707
        %v1778 = vpop.f32.mrf.mxu0
        %v1779 = vadd.f32 0.0, %v1778
        %v1780 = vpop.f32.mrf.mxu0
        %1781 = vmatprep.mubr.f32.mxu0 0.0
        %1782 = vmatmul.mubr.f32.gmra.mxu0 %v1710
        %v1783 = vpop.f32.mrf.mxu0
        %v1784 = vadd.f32 0.0, %v1783
        %v1785 = vpop.f32.mrf.mxu0
        %1786 = vdwg.mxu0
        %s1787 = scalar_lea.vmem %s684, 32 [#allocation3]
        %v1788 = vld [vmem:[%s1787] sm:$0xff]
        %v1789 = vld [vmem:[%s1787 + $0x8] sm:$0xff]
        %vm1790 = vcmp.gt.f32.partialorder %v1788, 0.0
        %vm1791 = vcmp.gt.f32.partialorder %v1789, 0.0
        %v1792 = vsel %vm1790, 1, 0
        %v1793 = vsel %vm1791, 1, 0
        %1794 = vset.pattern.permute.xlu0 0
        %1795 = vperm.xlu0 %1794, %v1792
        %v1796 = vpop.permute.xlu0 %1795
        %1797 = vset.pattern.permute.xlu0 0
        %1798 = vperm.xlu0 %1797, %v1793
        %v1799 = vpop.permute.xlu0 %1798
        %vm1800 = vcmp.eq.s32.totalorder %v1796, 1
        %vm1801 = vcmp.eq.s32.totalorder %v1799, 1
        %v1802 = vsel %vm1800, %v1779, -1e+30
        %v1803 = vsel %vm1801, %v1784, -1e+30
        %v1804 = vmax.f32 %v1256, %v1529
        %v1805 = vmax.f32 %v1257, %v1530
        %v1806 = vmax.f32 %v1804, %v1802
        %v1807 = vmax.f32 %v1805, %v1803
        %v1808 = vsub.f32 %v1256, %v1806
        %v1809 = vsub.f32 %v1257, %v1807
        %v1810 = vmul.f32 %v1808, 1.442695
        %v1811 = vpow.pop %v1810
        %v1812 = vmul.f32 %v1809, 1.442695
        %v1813 = vpow.pop %v1812
        %1815 = vset.pattern.permute.xlu0 0
        %1816 = vperm.xlu0 %1815, %v1242
        %v1817 = vpop.permute.xlu0 %1816
        %1820 = vset.pattern.permute.xlu0 0
        %1821 = vperm.xlu0 %1820, %v1243
        %v1822 = vpop.permute.xlu0 %1821
        %v1824 = vmul.f32 %v1811, %v1817
        %v1825 = vmul.f32 %v1813, %v1822
        %v1826 = vsub.f32 %v1529, %v1806
        %v1827 = vsub.f32 %v1530, %v1807
        %v1828 = vmul.f32 %v1826, 1.442695
        %v1829 = vpow.pop %v1828
        %v1830 = vmul.f32 %v1827, 1.442695
        %v1831 = vpow.pop %v1830
        %1833 = vset.pattern.permute.xlu0 0
        %1834 = vperm.xlu0 %1833, %v1515
        %v1835 = vpop.permute.xlu0 %1834
        %1838 = vset.pattern.permute.xlu0 0
        %1839 = vperm.xlu0 %1838, %v1516
        %v1840 = vpop.permute.xlu0 %1839
        %v1842 = vmul.f32 %v1829, %v1835
        %v1843 = vmul.f32 %v1831, %v1840
        %v1844 = vsub.f32 %v1802, %v1806
        %v1845 = vsub.f32 %v1803, %v1807
        %v1846 = vmul.f32 %v1844, 1.442695
        %v1847 = vpow.pop %v1846
        %v1848 = vmul.f32 %v1845, 1.442695
        %v1849 = vpow.pop %v1848
        %1851 = vset.pattern.permute.xlu0 0
        %1852 = vperm.xlu0 %1851, %v1788
        %v1853 = vpop.permute.xlu0 %1852
        %1856 = vset.pattern.permute.xlu0 0
        %1857 = vperm.xlu0 %1856, %v1789
        %v1858 = vpop.permute.xlu0 %1857
        %v1860 = vmul.f32 %v1847, %v1853
        %v1861 = vmul.f32 %v1849, %v1858
        %v1862 = vadd.f32 %v1824, %v1842
        %v1863 = vadd.f32 %v1825, %v1843
        %v1864 = vadd.f32 %v1862, %v1860
        %v1865 = vadd.f32 %v1863, %v1861
        %v1866 = vmax.f32 %v1864, 1e-30
        %v1867 = vmax.f32 %v1865, 1e-30
        %v1868 = vrcp.pop %v1866
        %v1869 = vmul.f32 1.0, %v1868
        %v1870 = vrcp.pop %v1867
        %v1871 = vmul.f32 1.0, %v1870
        %v1872 = vmul.f32 %v1824, %v1869
        %v1873 = vmul.f32 %v1825, %v1871
        %v1874 = vld [vmem:[%s12] sm:$0x1f]
        %vm1875 = vcmask 39936
        %v1877 = vsel %vm1875, %v1872, 0
        %v1880 = vsel %vm1875, %v1873, 0
        %vm1882 = vcmask 1044480
        %v1884 = vsel %vm1882, %v1874, 0
        %1886 = vmatprep.subr.mxu0 0.0
        %1887 = vmatpush1.msra.mxu0 0.0
        %1888 = vmatprep.subr.mxu0 0.0
        %1889 = vmatpush1.msra.mxu0 0.0
        %1890 = vmatprep.subr.mxu0 0.0
        %1891 = vmatpush1.msra.mxu0 0.0
        %1892 = vmatprep.subr.mxu0 0.0
        %1893 = vmatpush1.msra.mxu0 0.0
        %1894 = vmatprep.subr.mxu0 0.0
        %1895 = vmatpush1.msra.mxu0 0.0
        %1896 = vmatprep.subr.mxu0 0.0
        %1897 = vmatpush1.msra.mxu0 0.0
        %1898 = vmatprep.subr.mxu0 0.0
        %1899 = vmatpush1.msra.mxu0 0.0
        %1900 = vmatprep.subr.mxu0 0.0
        %1901 = vmatpush1.msra.mxu0 0.0
        %1902 = vmatprep.subr.mxu0 0.0
        %1903 = vmatpush1.msra.mxu0 0.0
        %1904 = vmatprep.subr.mxu0 0.0
        %1905 = vmatpush1.msra.mxu0 0.0
        %1906 = vmatprep.subr.mxu0 0.0
        %1907 = vmatpush1.msra.mxu0 0.0
        %1908 = vmatprep.subr.mxu0 0.0
        %1909 = vmatpush1.msra.mxu0 0.0
        %1910 = vmatprep.subr.mxu0 0.0
        %1911 = vmatpush1.msra.mxu0 0.0
        %1912 = vmatprep.subr.mxu0 0.0
        %1913 = vmatpush1.msra.mxu0 0.0
        %1914 = vmatprep.subr.mxu0 0.0
        %1915 = vmatpush1.msra.mxu0 0.0
        %1916 = vmatprep.subr.mxu0 0.0
        %1917 = vmatpush1.msra.mxu0 %v1884
        %1918 = vmatprep.subr.mxu0 0.0
        %1919 = vmatpush2.msra.mxu0 0.0
        %1920 = vmatprep.subr.mxu0 0.0
        %1921 = vmatpush2.msra.mxu0 0.0
        %1922 = vmatprep.subr.mxu0 0.0
        %1923 = vmatpush2.msra.mxu0 0.0
        %1924 = vmatprep.subr.mxu0 0.0
        %1925 = vmatpush2.msra.mxu0 0.0
        %1926 = vmatprep.subr.mxu0 0.0
        %1927 = vmatpush2.msra.mxu0 0.0
        %1928 = vmatprep.subr.mxu0 0.0
        %1929 = vmatpush2.msra.mxu0 0.0
        %1930 = vmatprep.subr.mxu0 0.0
        %1931 = vmatpush2.msra.mxu0 0.0
        %1932 = vmatprep.subr.mxu0 0.0
        %1933 = vmatpush2.msra.mxu0 0.0
        %1934 = vmatprep.subr.mxu0 0.0
        %1935 = vmatpush2.msra.mxu0 0.0
        %1936 = vmatprep.subr.mxu0 0.0
        %1937 = vmatpush2.msra.mxu0 0.0
        %1938 = vmatprep.subr.mxu0 0.0
        %1939 = vmatpush2.msra.mxu0 0.0
        %1940 = vmatprep.subr.mxu0 0.0
        %1941 = vmatpush2.msra.mxu0 0.0
        %1942 = vmatprep.subr.mxu0 0.0
        %1943 = vmatpush2.msra.mxu0 0.0
        %1944 = vmatprep.subr.mxu0 0.0
        %1945 = vmatpush2.msra.mxu0 0.0
        %1946 = vmatprep.subr.mxu0 0.0
        %1947 = vmatpush2.msra.mxu0 0.0
        %1948 = vmatprep.subr.mxu0 0.0
        %1949 = vmatpush2.msra.mxu0 0.0
        %1950 = vmatprep.mubr.f32.mxu0 0.0
        %1951 = vmatmul.mubr.f32.gmra.mxu0 %v1877
        %v1952 = vpop.f32.mrf.mxu0
        %v1953 = vadd.f32 0.0, %v1952
        %v1954 = vpop.f32.mrf.mxu0
        %1955 = vmatprep.mubr.f32.mxu0 0.0
        %1956 = vmatmul.mubr.f32.gmra.mxu0 %v1880
        %v1957 = vpop.f32.mrf.mxu0
        %v1958 = vadd.f32 0.0, %v1957
        %v1959 = vpop.f32.mrf.mxu0
        %1960 = vdwg.mxu0
        %v1961 = vmul.f32 %v1953, %v1134
        %v1962 = vmul.f32 %v1958, %v1139
        %v1963 = vmul.f32 %v1842, %v1869
        %v1964 = vmul.f32 %v1843, %v1871
        %v1966 = vsel %vm1875, %v1963, 0
        %v1969 = vsel %vm1875, %v1964, 0
        %1971 = vmatprep.subr.mxu0 0.0
        %1972 = vmatpush1.msra.mxu0 0.0
        %1973 = vmatprep.subr.mxu0 0.0
        %1974 = vmatpush1.msra.mxu0 0.0
        %1975 = vmatprep.subr.mxu0 0.0
        %1976 = vmatpush1.msra.mxu0 0.0
        %1977 = vmatprep.subr.mxu0 0.0
        %1978 = vmatpush1.msra.mxu0 0.0
        %1979 = vmatprep.subr.mxu0 0.0
        %1980 = vmatpush1.msra.mxu0 0.0
        %1981 = vmatprep.subr.mxu0 0.0
        %1982 = vmatpush1.msra.mxu0 0.0
        %1983 = vmatprep.subr.mxu0 0.0
        %1984 = vmatpush1.msra.mxu0 0.0
        %1985 = vmatprep.subr.mxu0 0.0
        %1986 = vmatpush1.msra.mxu0 0.0
        %1987 = vmatprep.subr.mxu0 0.0
        %1988 = vmatpush1.msra.mxu0 0.0
        %1989 = vmatprep.subr.mxu0 0.0
        %1990 = vmatpush1.msra.mxu0 0.0
        %1991 = vmatprep.subr.mxu0 0.0
        %1992 = vmatpush1.msra.mxu0 0.0
        %1993 = vmatprep.subr.mxu0 0.0
        %1994 = vmatpush1.msra.mxu0 0.0
        %1995 = vmatprep.subr.mxu0 0.0
        %1996 = vmatpush1.msra.mxu0 0.0
        %1997 = vmatprep.subr.mxu0 0.0
        %1998 = vmatpush1.msra.mxu0 0.0
        %1999 = vmatprep.subr.mxu0 0.0
        %2000 = vmatpush1.msra.mxu0 0.0
        %2001 = vmatprep.subr.mxu0 0.0
        %2002 = vmatpush1.msra.mxu0 %v1884
        %2003 = vmatprep.subr.mxu0 0.0
        %2004 = vmatpush2.msra.mxu0 0.0
        %2005 = vmatprep.subr.mxu0 0.0
        %2006 = vmatpush2.msra.mxu0 0.0
        %2007 = vmatprep.subr.mxu0 0.0
        %2008 = vmatpush2.msra.mxu0 0.0
        %2009 = vmatprep.subr.mxu0 0.0
        %2010 = vmatpush2.msra.mxu0 0.0
        %2011 = vmatprep.subr.mxu0 0.0
        %2012 = vmatpush2.msra.mxu0 0.0
        %2013 = vmatprep.subr.mxu0 0.0
        %2014 = vmatpush2.msra.mxu0 0.0
        %2015 = vmatprep.subr.mxu0 0.0
        %2016 = vmatpush2.msra.mxu0 0.0
        %2017 = vmatprep.subr.mxu0 0.0
        %2018 = vmatpush2.msra.mxu0 0.0
        %2019 = vmatprep.subr.mxu0 0.0
        %2020 = vmatpush2.msra.mxu0 0.0
        %2021 = vmatprep.subr.mxu0 0.0
        %2022 = vmatpush2.msra.mxu0 0.0
        %2023 = vmatprep.subr.mxu0 0.0
        %2024 = vmatpush2.msra.mxu0 0.0
        %2025 = vmatprep.subr.mxu0 0.0
        %2026 = vmatpush2.msra.mxu0 0.0
        %2027 = vmatprep.subr.mxu0 0.0
        %2028 = vmatpush2.msra.mxu0 0.0
        %2029 = vmatprep.subr.mxu0 0.0
        %2030 = vmatpush2.msra.mxu0 0.0
        %2031 = vmatprep.subr.mxu0 0.0
        %2032 = vmatpush2.msra.mxu0 0.0
        %2033 = vmatprep.subr.mxu0 0.0
        %2034 = vmatpush2.msra.mxu0 0.0
        %2035 = vmatprep.mubr.f32.mxu0 0.0
        %2036 = vmatmul.mubr.f32.gmra.mxu0 %v1966
        %v2037 = vpop.f32.mrf.mxu0
        %v2038 = vadd.f32 0.0, %v2037
        %v2039 = vpop.f32.mrf.mxu0
        %2040 = vmatprep.mubr.f32.mxu0 0.0
        %2041 = vmatmul.mubr.f32.gmra.mxu0 %v1969
        %v2042 = vpop.f32.mrf.mxu0
        %v2043 = vadd.f32 0.0, %v2042
        %v2044 = vpop.f32.mrf.mxu0
        %2045 = vdwg.mxu0
        %v2046 = vmul.f32 %v2038, %v1417
        %v2047 = vmul.f32 %v2043, %v1422
        %v2048 = vadd.f32 %v1961, %v2046
        %v2049 = vadd.f32 %v1962, %v2047
        %v2050 = vmul.f32 %v1860, %v1869
        %v2051 = vmul.f32 %v1861, %v1871
        %v2053 = vsel %vm1875, %v2050, 0
        %v2056 = vsel %vm1875, %v2051, 0
        %2058 = vmatprep.subr.mxu0 0.0
        %2059 = vmatpush1.msra.mxu0 0.0
        %2060 = vmatprep.subr.mxu0 0.0
        %2061 = vmatpush1.msra.mxu0 0.0
        %2062 = vmatprep.subr.mxu0 0.0
        %2063 = vmatpush1.msra.mxu0 0.0
        %2064 = vmatprep.subr.mxu0 0.0
        %2065 = vmatpush1.msra.mxu0 0.0
        %2066 = vmatprep.subr.mxu0 0.0
        %2067 = vmatpush1.msra.mxu0 0.0
        %2068 = vmatprep.subr.mxu0 0.0
        %2069 = vmatpush1.msra.mxu0 0.0
        %2070 = vmatprep.subr.mxu0 0.0
        %2071 = vmatpush1.msra.mxu0 0.0
        %2072 = vmatprep.subr.mxu0 0.0
        %2073 = vmatpush1.msra.mxu0 0.0
        %2074 = vmatprep.subr.mxu0 0.0
        %2075 = vmatpush1.msra.mxu0 0.0
        %2076 = vmatprep.subr.mxu0 0.0
        %2077 = vmatpush1.msra.mxu0 0.0
        %2078 = vmatprep.subr.mxu0 0.0
        %2079 = vmatpush1.msra.mxu0 0.0
        %2080 = vmatprep.subr.mxu0 0.0
        %2081 = vmatpush1.msra.mxu0 0.0
        %2082 = vmatprep.subr.mxu0 0.0
        %2083 = vmatpush1.msra.mxu0 0.0
        %2084 = vmatprep.subr.mxu0 0.0
        %2085 = vmatpush1.msra.mxu0 0.0
        %2086 = vmatprep.subr.mxu0 0.0
        %2087 = vmatpush1.msra.mxu0 0.0
        %2088 = vmatprep.subr.mxu0 0.0
        %2089 = vmatpush1.msra.mxu0 %v1884
        %2090 = vmatprep.subr.mxu0 0.0
        %2091 = vmatpush2.msra.mxu0 0.0
        %2092 = vmatprep.subr.mxu0 0.0
        %2093 = vmatpush2.msra.mxu0 0.0
        %2094 = vmatprep.subr.mxu0 0.0
        %2095 = vmatpush2.msra.mxu0 0.0
        %2096 = vmatprep.subr.mxu0 0.0
        %2097 = vmatpush2.msra.mxu0 0.0
        %2098 = vmatprep.subr.mxu0 0.0
        %2099 = vmatpush2.msra.mxu0 0.0
        %2100 = vmatprep.subr.mxu0 0.0
        %2101 = vmatpush2.msra.mxu0 0.0
        %2102 = vmatprep.subr.mxu0 0.0
        %2103 = vmatpush2.msra.mxu0 0.0
        %2104 = vmatprep.subr.mxu0 0.0
        %2105 = vmatpush2.msra.mxu0 0.0
        %2106 = vmatprep.subr.mxu0 0.0
        %2107 = vmatpush2.msra.mxu0 0.0
        %2108 = vmatprep.subr.mxu0 0.0
        %2109 = vmatpush2.msra.mxu0 0.0
        %2110 = vmatprep.subr.mxu0 0.0
        %2111 = vmatpush2.msra.mxu0 0.0
        %2112 = vmatprep.subr.mxu0 0.0
        %2113 = vmatpush2.msra.mxu0 0.0
        %2114 = vmatprep.subr.mxu0 0.0
        %2115 = vmatpush2.msra.mxu0 0.0
        %2116 = vmatprep.subr.mxu0 0.0
        %2117 = vmatpush2.msra.mxu0 0.0
        %2118 = vmatprep.subr.mxu0 0.0
        %2119 = vmatpush2.msra.mxu0 0.0
        %2120 = vmatprep.subr.mxu0 0.0
        %2121 = vmatpush2.msra.mxu0 0.0
        %2122 = vmatprep.mubr.f32.mxu0 0.0
        %2123 = vmatmul.mubr.f32.gmra.mxu0 %v2053
        %v2124 = vpop.f32.mrf.mxu0
        %v2125 = vadd.f32 0.0, %v2124
        %v2126 = vpop.f32.mrf.mxu0
        %2127 = vmatprep.mubr.f32.mxu0 0.0
        %2128 = vmatmul.mubr.f32.gmra.mxu0 %v2056
        %v2129 = vpop.f32.mrf.mxu0
        %v2130 = vadd.f32 0.0, %v2129
        %v2131 = vpop.f32.mrf.mxu0
        %2132 = vdwg.mxu0
        %v2133 = vmul.f32 %v2125, %v1690
        %v2134 = vmul.f32 %v2130, %v1695
        %v2135 = vadd.f32 %v2048, %v2133
        %v2136 = vadd.f32 %v2049, %v2134
        %v2137 = vld [vmem:[%s13] sm:$0x1]
        %v2139 = vlaneseq
        %v2140 = vshrl.u32 %v2139, 7
        %v2141 = vsub.s32 0, %v2140
        %v2142 = vrot.slane %v2137, %v2141
        %v2144 = vadd.f32 %v2135, %v2142
        %v2145 = vadd.f32 %v2136, %v2142
        %v2146 = vmax.f32 %v2144, 0.0
        %v2147 = vmax.f32 %v2145, 0.0
        %v2148 = vld [vmem:[%s14] sm:$0xff]
        %v2149 = vld [vmem:[%s14 + $0x8] sm:$0xff]
        %v2150 = vld [vmem:[%s15] sm:$0xff]
        %v2151 = vld [vmem:[%s15 + $0x8] sm:$0xff]
        %v2152 = vld [vmem:[%s15 + $0x10] sm:$0xff]
        %v2153 = vld [vmem:[%s15 + $0x18] sm:$0xff]
        %v2154 = vld [vmem:[%s15 + $0x20] sm:$0xff]
        %v2155 = vld [vmem:[%s15 + $0x28] sm:$0xff]
        %v2156 = vld [vmem:[%s15 + $0x30] sm:$0xff]
        %v2157 = vld [vmem:[%s15 + $0x38] sm:$0xff]
        %v2158 = vld [vmem:[%s15 + $0x40] sm:$0xff]
        %v2159 = vld [vmem:[%s15 + $0x48] sm:$0xff]
        %v2161 = vsel %vm1160, %v2146, 0
        %v2164 = vsel %vm1160, %v2147, 0
        %2166 = vmatprep.subr.mxu0 0.0
        %2167 = vmatpush1.msra.mxu0 0.0
        %2168 = vmatprep.subr.mxu0 0.0
        %2169 = vmatpush1.msra.mxu0 0.0
        %2170 = vmatprep.subr.mxu0 0.0
        %2171 = vmatpush1.msra.mxu0 0.0
        %2172 = vmatprep.subr.mxu0 0.0
        %2173 = vmatpush1.msra.mxu0 0.0
        %2174 = vmatprep.subr.mxu0 0.0
        %2175 = vmatpush1.msra.mxu0 0.0
        %2176 = vmatprep.subr.mxu0 0.0
        %2177 = vmatpush1.msra.mxu0 0.0
        %2178 = vmatprep.subr.mxu0 0.0
        %2179 = vmatpush1.msra.mxu0 %v2159
        %2180 = vmatprep.subr.mxu0 0.0
        %2181 = vmatpush1.msra.mxu0 %v2158
        %2182 = vmatprep.subr.mxu0 0.0
        %2183 = vmatpush1.msra.mxu0 %v2157
        %2184 = vmatprep.subr.mxu0 0.0
        %2185 = vmatpush1.msra.mxu0 %v2156
        %2186 = vmatprep.subr.mxu0 0.0
        %2187 = vmatpush1.msra.mxu0 %v2155
        %2188 = vmatprep.subr.mxu0 0.0
        %2189 = vmatpush1.msra.mxu0 %v2154
        %2190 = vmatprep.subr.mxu0 0.0
        %2191 = vmatpush1.msra.mxu0 %v2153
        %2192 = vmatprep.subr.mxu0 0.0
        %2193 = vmatpush1.msra.mxu0 %v2152
        %2194 = vmatprep.subr.mxu0 0.0
        %2195 = vmatpush1.msra.mxu0 %v2151
        %2196 = vmatprep.subr.mxu0 0.0
        %2197 = vmatpush1.msra.mxu0 %v2150
        %2198 = vmatprep.subr.mxu0 0.0
        %2199 = vmatpush2.msra.mxu0 0.0
        %2200 = vmatprep.subr.mxu0 0.0
        %2201 = vmatpush2.msra.mxu0 0.0
        %2202 = vmatprep.subr.mxu0 0.0
        %2203 = vmatpush2.msra.mxu0 0.0
        %2204 = vmatprep.subr.mxu0 0.0
        %2205 = vmatpush2.msra.mxu0 0.0
        %2206 = vmatprep.subr.mxu0 0.0
        %2207 = vmatpush2.msra.mxu0 0.0
        %2208 = vmatprep.subr.mxu0 0.0
        %2209 = vmatpush2.msra.mxu0 0.0
        %2210 = vmatprep.subr.mxu0 0.0
        %2211 = vmatpush2.msra.mxu0 0.0
        %2212 = vmatprep.subr.mxu0 0.0
        %2213 = vmatpush2.msra.mxu0 0.0
        %2214 = vmatprep.subr.mxu0 0.0
        %2215 = vmatpush2.msra.mxu0 0.0
        %2216 = vmatprep.subr.mxu0 0.0
        %2217 = vmatpush2.msra.mxu0 0.0
        %2218 = vmatprep.subr.mxu0 0.0
        %2219 = vmatpush2.msra.mxu0 0.0
        %2220 = vmatprep.subr.mxu0 0.0
        %2221 = vmatpush2.msra.mxu0 0.0
        %2222 = vmatprep.subr.mxu0 0.0
        %2223 = vmatpush2.msra.mxu0 0.0
        %2224 = vmatprep.subr.mxu0 0.0
        %2225 = vmatpush2.msra.mxu0 0.0
        %2226 = vmatprep.subr.mxu0 0.0
        %2227 = vmatpush2.msra.mxu0 0.0
        %2228 = vmatprep.subr.mxu0 0.0
        %2229 = vmatpush2.msra.mxu0 0.0
        %2230 = vmatprep.mubr.f32.mxu0 0.0
        %2231 = vmatmul.mubr.f32.gmra.mxu0 %v2161
        %v2232 = vpop.f32.mrf.mxu0
        %v2233 = vadd.f32 0.0, %v2232
        %v2234 = vpop.f32.mrf.mxu0
        %2235 = vmatprep.mubr.f32.mxu0 0.0
        %2236 = vmatmul.mubr.f32.gmra.mxu0 %v2164
        %v2237 = vpop.f32.mrf.mxu0
        %v2238 = vadd.f32 0.0, %v2237
        %v2239 = vpop.f32.mrf.mxu0
        %2240 = vdwg.mxu0
        %2241 = vmatprep.subr.mxu0 0.0
        %2242 = vmatpush1.msra.mxu0 0.0
        %2243 = vmatprep.subr.mxu0 0.0
        %2244 = vmatpush1.msra.mxu0 0.0
        %2245 = vmatprep.subr.mxu0 0.0
        %2246 = vmatpush1.msra.mxu0 0.0
        %2247 = vmatprep.subr.mxu0 0.0
        %2248 = vmatpush1.msra.mxu0 0.0
        %2249 = vmatprep.subr.mxu0 0.0
        %2250 = vmatpush1.msra.mxu0 0.0
        %2251 = vmatprep.subr.mxu0 0.0
        %2252 = vmatpush1.msra.mxu0 0.0
        %2253 = vmatprep.subr.mxu0 0.0
        %2254 = vmatpush1.msra.mxu0 0.0
        %2255 = vmatprep.subr.mxu0 0.0
        %2256 = vmatpush1.msra.mxu0 0.0
        %2257 = vmatprep.subr.mxu0 0.0
        %2258 = vmatpush1.msra.mxu0 0.0
        %2259 = vmatprep.subr.mxu0 0.0
        %2260 = vmatpush1.msra.mxu0 0.0
        %2261 = vmatprep.subr.mxu0 0.0
        %2262 = vmatpush1.msra.mxu0 0.0
        %2263 = vmatprep.subr.mxu0 0.0
        %2264 = vmatpush1.msra.mxu0 0.0
        %2265 = vmatprep.subr.mxu0 0.0
        %2266 = vmatpush1.msra.mxu0 0.0
        %2267 = vmatprep.subr.mxu0 0.0
        %2268 = vmatpush1.msra.mxu0 0.0
        %2269 = vmatprep.subr.mxu0 0.0
        %2270 = vmatpush1.msra.mxu0 %v2149
        %2271 = vmatprep.subr.mxu0 0.0
        %2272 = vmatpush1.msra.mxu0 %v2148
        %2273 = vmatprep.subr.mxu0 0.0
        %2274 = vmatpush2.msra.mxu0 0.0
        %2275 = vmatprep.subr.mxu0 0.0
        %2276 = vmatpush2.msra.mxu0 0.0
        %2277 = vmatprep.subr.mxu0 0.0
        %2278 = vmatpush2.msra.mxu0 0.0
        %2279 = vmatprep.subr.mxu0 0.0
        %2280 = vmatpush2.msra.mxu0 0.0
        %2281 = vmatprep.subr.mxu0 0.0
        %2282 = vmatpush2.msra.mxu0 0.0
        %2283 = vmatprep.subr.mxu0 0.0
        %2284 = vmatpush2.msra.mxu0 0.0
        %2285 = vmatprep.subr.mxu0 0.0
        %2286 = vmatpush2.msra.mxu0 0.0
        %2287 = vmatprep.subr.mxu0 0.0
        %2288 = vmatpush2.msra.mxu0 0.0
        %2289 = vmatprep.subr.mxu0 0.0
        %2290 = vmatpush2.msra.mxu0 0.0
        %2291 = vmatprep.subr.mxu0 0.0
        %2292 = vmatpush2.msra.mxu0 0.0
        %2293 = vmatprep.subr.mxu0 0.0
        %2294 = vmatpush2.msra.mxu0 0.0
        %2295 = vmatprep.subr.mxu0 0.0
        %2296 = vmatpush2.msra.mxu0 0.0
        %2297 = vmatprep.subr.mxu0 0.0
        %2298 = vmatpush2.msra.mxu0 0.0
        %2299 = vmatprep.subr.mxu0 0.0
        %2300 = vmatpush2.msra.mxu0 0.0
        %2301 = vmatprep.subr.mxu0 0.0
        %2302 = vmatpush2.msra.mxu0 0.0
        %2303 = vmatprep.subr.mxu0 0.0
        %2304 = vmatpush2.msra.mxu0 0.0
        %2305 = vmatprep.mubr.f32.mxu0 0.0
        %2306 = vmatmul.mubr.f32.gmra.mxu0 %v872
        %v2307 = vpop.f32.mrf.mxu0
        %v2308 = vadd.f32 %v2233, %v2307
        %v2309 = vpop.f32.mrf.mxu0
        %2310 = vmatprep.mubr.f32.mxu0 0.0
        %2311 = vmatmul.mubr.f32.gmra.mxu0 %v875
        %v2312 = vpop.f32.mrf.mxu0
        %v2313 = vadd.f32 %v2238, %v2312
        %v2314 = vpop.f32.mrf.mxu0
        %2315 = vdwg.mxu0
        %v2316 = vld [vmem:[%s16] sm:$0x1]
        %v2318 = vlaneseq
        %v2319 = vshrl.u32 %v2318, 7
        %v2320 = vsub.s32 0, %v2319
        %v2321 = vrot.slane %v2316, %v2320
        %v2323 = vadd.f32 %v2308, %v2321
        %v2324 = vadd.f32 %v2313, %v2321
        %v2325 = vmax.f32 %v2323, 0.0
        %v2326 = vmax.f32 %v2324, 0.0
        %v2327 = vld [vmem:[%s17] sm:$0xff]
        %v2328 = vld [vmem:[%s18] sm:$0x1]
        %v2330 = vlaneseq
        %v2331 = vshrl.u32 %v2330, 7
        %v2332 = vsub.s32 0, %v2331
        %v2333 = vrot.slane %v2328, %v2332
        %vm2335 = vcmask 64512
        %v2337 = vsel %vm2335, %v2325, 0
        %v2340 = vsel %vm2335, %v2326, 0
        %2342 = vmatprep.subr.mxu0 0.0
        %2343 = vmatpush1.msra.mxu0 0.0
        %2344 = vmatprep.subr.mxu0 0.0
        %2345 = vmatpush1.msra.mxu0 0.0
        %2346 = vmatprep.subr.mxu0 0.0
        %2347 = vmatpush1.msra.mxu0 0.0
        %2348 = vmatprep.subr.mxu0 0.0
        %2349 = vmatpush1.msra.mxu0 0.0
        %2350 = vmatprep.subr.mxu0 0.0
        %2351 = vmatpush1.msra.mxu0 0.0
        %2352 = vmatprep.subr.mxu0 0.0
        %2353 = vmatpush1.msra.mxu0 0.0
        %2354 = vmatprep.subr.mxu0 0.0
        %2355 = vmatpush1.msra.mxu0 0.0
        %2356 = vmatprep.subr.mxu0 0.0
        %2357 = vmatpush1.msra.mxu0 0.0
        %2358 = vmatprep.subr.mxu0 0.0
        %2359 = vmatpush1.msra.mxu0 0.0
        %2360 = vmatprep.subr.mxu0 0.0
        %2361 = vmatpush1.msra.mxu0 0.0
        %2362 = vmatprep.subr.mxu0 0.0
        %2363 = vmatpush1.msra.mxu0 0.0
        %2364 = vmatprep.subr.mxu0 0.0
        %2365 = vmatpush1.msra.mxu0 0.0
        %2366 = vmatprep.subr.mxu0 0.0
        %2367 = vmatpush1.msra.mxu0 0.0
        %2368 = vmatprep.subr.mxu0 0.0
        %2369 = vmatpush1.msra.mxu0 0.0
        %2370 = vmatprep.subr.mxu0 0.0
        %2371 = vmatpush1.msra.mxu0 0.0
        %2372 = vmatprep.subr.mxu0 0.0
        %2373 = vmatpush1.msra.mxu0 %v2327
        %2374 = vmatprep.subr.mxu0 0.0
        %2375 = vmatpush2.msra.mxu0 0.0
        %2376 = vmatprep.subr.mxu0 0.0
        %2377 = vmatpush2.msra.mxu0 0.0
        %2378 = vmatprep.subr.mxu0 0.0
        %2379 = vmatpush2.msra.mxu0 0.0
        %2380 = vmatprep.subr.mxu0 0.0
        %2381 = vmatpush2.msra.mxu0 0.0
        %2382 = vmatprep.subr.mxu0 0.0
        %2383 = vmatpush2.msra.mxu0 0.0
        %2384 = vmatprep.subr.mxu0 0.0
        %2385 = vmatpush2.msra.mxu0 0.0
        %2386 = vmatprep.subr.mxu0 0.0
        %2387 = vmatpush2.msra.mxu0 0.0
        %2388 = vmatprep.subr.mxu0 0.0
        %2389 = vmatpush2.msra.mxu0 0.0
        %2390 = vmatprep.subr.mxu0 0.0
        %2391 = vmatpush2.msra.mxu0 0.0
        %2392 = vmatprep.subr.mxu0 0.0
        %2393 = vmatpush2.msra.mxu0 0.0
        %2394 = vmatprep.subr.mxu0 0.0
        %2395 = vmatpush2.msra.mxu0 0.0
        %2396 = vmatprep.subr.mxu0 0.0
        %2397 = vmatpush2.msra.mxu0 0.0
        %2398 = vmatprep.subr.mxu0 0.0
        %2399 = vmatpush2.msra.mxu0 0.0
        %2400 = vmatprep.subr.mxu0 0.0
        %2401 = vmatpush2.msra.mxu0 0.0
        %2402 = vmatprep.subr.mxu0 0.0
        %2403 = vmatpush2.msra.mxu0 0.0
        %2404 = vmatprep.subr.mxu0 0.0
        %2405 = vmatpush2.msra.mxu0 0.0
        %2406 = vmatprep.mubr.f32.mxu0 0.0
        %2407 = vmatmul.mubr.f32.gmra.mxu0 %v2337
        %v2408 = vpop.f32.mrf.mxu0
        %v2409 = vadd.f32 %v2333, %v2408
        %v2410 = vpop.f32.mrf.mxu0
        %2411 = vmatprep.mubr.f32.mxu0 0.0
        %2412 = vmatmul.mubr.f32.gmra.mxu0 %v2340
        %v2413 = vpop.f32.mrf.mxu0
        %v2414 = vadd.f32 %v2333, %v2413
        %v2415 = vpop.f32.mrf.mxu0
        %2416 = vdwg.mxu0
        %vm2417 = vcmask 23552
        %2418 = vst.msk [vmem:[%s758] sm:$0xff] %vm2417, %v2409
        %2419 = vst.msk [vmem:[%s758 + $0x8] sm:$0xff] %vm2417, %v2414
        %s2420 = smul.u32 2, %s30
        %p2421 = scmp.lt.s32.totalorder %s2420, 5
        %s2422 = scalar_select %p2421, %s2420, 5
        %s2423 = smul.addr %s2422, 8
        %s2424 = scalar_lea.vmem %s19, %s2423
        // Predicated region
        $region173: #{tpu_custom_call.1} parent=163 // pred_check
          %p2425 = pneg %p462
        $region174: #{tpu_custom_call.1} parent=163 // pred_check_branch
          %2427 = sbr.rel (%p2425) target = $region176
        $region175: #{tpu_custom_call.1} parent=163 // pred_region
          %s2428 = smul.u32 2, %s30
        $region176: #{tpu_custom_call.1} parent=163 // pred_fallthru
          _
      $region164: #{tpu_custom_call.1} parent=5 // pred_fallthru
        _
      %p2429 = scmp.le.s32.totalorder 2, %s25
      // Predicated region
      $region177: #{tpu_custom_call.1} parent=5 // pred_check
        %p2430 = pneg %p2429
      $region178: #{tpu_custom_call.1} parent=5 // pred_check_branch
        %2432 = sbr.rel (%p2430) target = $region180
      $region179: #{tpu_custom_call.1} parent=5 // pred_region
        %s2433 = ssub.s32 %s25, 2
        // Predicated region
        $region181: #{tpu_custom_call.1} parent=179 // pred_check
          %p2434 = pneg %p468
        $region182: #{tpu_custom_call.1} parent=179 // pred_check_branch
          %2436 = sbr.rel (%p2434) target = $region184
        $region183: #{tpu_custom_call.1} parent=179 // pred_region
          %s2437 = smul.u32 2, %s31
          %p2438 = scmp.lt.s32.totalorder %s2437, 5
          %s2439 = scalar_select %p2438, %s2437, 5
          %s2440 = smul.addr %s2439, 8
          %s2441 = scalar_lea.vmem %s19, %s2440
        $region184: #{tpu_custom_call.1} parent=179 // pred_fallthru
          _
      $region180: #{tpu_custom_call.1} parent=5 // pred_fallthru
        _
    $region6: #{tpu_custom_call.1} parent=1 // loop_footer
      %s29 = sadd.s32 1, %s25
    $region7: #{tpu_custom_call.1} parent=1 // loop_footer_branch
      %24 = sbr.rel target = $region3
    $region8: #{tpu_custom_call.1} parent=1 // loop_exit
      _

</llo_original>
